<compile_context>
chip_gen: v7x
topology: tpu7x:2x2x1
jax: 0.10.0
libtpu: 0.0.40
codegen_flags: <defaults>
</compile_context>

<pallas_src>
import jax
import jax.numpy as jnp
from jax.experimental import pallas as pl
from jax.experimental.pallas import tpu as pltpu


def _gcn_fused_kernel(h_ref, w_ref, adj_ref, b_ref, o_ref, xw_ref):
    # One-time feature transform into the persistent VMEM scratch (bf16).
    @pl.when(pl.program_id(0) == 0)
    def _():
        xw_ref[...] = jnp.dot(
            h_ref[...], w_ref[...], preferred_element_type=jnp.float32
        ).astype(xw_ref.dtype)

    # Row-tile aggregation: (tm, N) @ (N, D_out) on the MXU, f32 accumulate.
    acc = jnp.dot(adj_ref[...], xw_ref[...], preferred_element_type=jnp.float32)
    acc = acc + b_ref[...]            # (1, D_out) f32 bias, broadcasts over rows
    o_ref[...] = jnp.maximum(acc, 0.0).astype(o_ref.dtype)   # activation = ReLU


def gcn_layer_forward(adj, h, W, b, *, tm=256):
    """Pallas implementation of GCNLayer.forward (eval mode, ReLU activation)."""
    N, D_in = h.shape
    D_out = W.shape[1]
    assert adj.shape == (N, N)

    tm = min(tm, N)
    assert N % tm == 0 and tm % 8 == 0, "row tile must divide N and be 8-aligned"
    # All blocks below either span the full array dim or are 8/128-aligned,
    # which satisfies the (8,128) BlockSpec constraint for these shapes.
    assert N % 8 == 0 and D_out % 128 == 0, "pad N to mult of 8, D_out to mult of 128"

    # TODO(synk): nn.Dropout is stochastic in train mode; eval mode is identity,
    # so it is omitted here.

    # bf16 operands feed the MXU; accumulation stays f32 inside the kernel.
    adj_bf = adj.astype(jnp.bfloat16)
    h_bf = h.astype(jnp.bfloat16)
    w_bf = W.astype(jnp.bfloat16)
    b2d = b.reshape(1, D_out).astype(jnp.float32)

    # VMEM budget: double-buffered inputs/outputs + resident XW scratch.
    # TODO(synk): for graphs where this no longer fits (esp. v7x's 64 MiB VMEM),
    # add a K-tiled accumulator path instead of keeping full XW resident.
    vmem_limit = 32 * 1024 * 1024
    vmem_bytes = (
        2 * (N * D_in * 2 + D_in * D_out * 2 + tm * N * 2 + D_out * 4)  # inputs
        + 2 * (tm * D_out * 4)                                          # output
        + N * D_out * 2                                                 # XW scratch
    )
    assert vmem_bytes < vmem_limit, "tiles + XW scratch exceed VMEM budget"

    cost = pl.CostEstimate(
        flops=2 * N * D_in * D_out + 2 * N * N * D_out,
        transcendentals=0,
        bytes_accessed=(
            adj_bf.size * 2 + h_bf.size * 2 + w_bf.size * 2
            + b2d.size * 4 + N * D_out * 4
        ),
    )

    out = pl.pallas_call(
        _gcn_fused_kernel,
        out_shape=jax.ShapeDtypeStruct((N, D_out), jnp.float32),
        grid_spec=pltpu.PrefetchScalarGridSpec(
            num_scalar_prefetch=0,
            grid=(N // tm,),
            in_specs=[
                pl.BlockSpec((N, D_in), lambda i: (0, 0)),      # full h
                pl.BlockSpec((D_in, D_out), lambda i: (0, 0)),  # full W
                pl.BlockSpec((tm, N), lambda i: (i, 0)),        # adj row tile
                pl.BlockSpec((1, D_out), lambda i: (0, 0)),     # bias
            ],
            out_specs=pl.BlockSpec((tm, D_out), lambda i: (i, 0)),
            scratch_shapes=[pltpu.VMEM((N, D_out), jnp.bfloat16)],  # resident XW
        ),
        compiler_params=pltpu.CompilerParams(
            dimension_semantics=("arbitrary",),
            vmem_limit_bytes=vmem_limit,
        ),
        cost_estimate=cost,
    )(h_bf, w_bf, adj_bf, b2d)
    return out


if __name__ == "__main__":
    # Small, tile-friendly shapes: N nodes, D_in input feats, D_out output feats.
    N, D_in, D_out = 512, 64, 128

    key = jax.random.PRNGKey(0)
    k_adj, k_h, k_w = jax.random.split(key, 3)

    # Deterministic parameter init mirroring GCNLayer.init_params:
    #   W: xavier uniform, b: zeros
    limit = (6.0 / (D_in + D_out)) ** 0.5
    W = jax.random.uniform(k_w, (D_in, D_out), jnp.float32, -limit, limit)
    b = jnp.zeros((D_out,), jnp.float32)

    # Example inputs: random features, row-normalized random adjacency.
    h = jax.random.normal(k_h, (N, D_in), jnp.float32)
    adj_raw = (jax.random.uniform(k_adj, (N, N)) < 0.05).astype(jnp.float32)
    adj_raw = adj_raw + jnp.eye(N, dtype=jnp.float32)          # self loops
    adj = adj_raw / jnp.sum(adj_raw, axis=1, keepdims=True)    # row-normalize

    out = gcn_layer_forward(adj, h, W, b)
    out = jax.block_until_ready(out)

    # Sanity check against plain-JAX f32 reference. Kernel uses bf16 operands
    # with f32 accumulation, so tolerance covers bf16 quantization of adj/h/W.
    ref = jnp.maximum(adj @ (h @ W) + b, 0.0)
    assert out.shape == (N, D_out)
    assert jnp.allclose(out, ref, atol=3e-2, rtol=3e-2), float(
        jnp.max(jnp.abs(out - ref))
    )

    print("KERNEL_OK")
</pallas_src>

<mosaic_0001>
module attributes {stable_mosaic.version = 11 : i64} {
  func.func @_gcn_fused_kernel(%arg0: i32, %arg1: memref<512x64xbf16, #tpu.memory_space<vmem>>, %arg2: memref<64x128xbf16, #tpu.memory_space<vmem>>, %arg3: memref<256x512xbf16, #tpu.memory_space<vmem>>, %arg4: memref<1x128xf32, #tpu.memory_space<vmem>>, %arg5: memref<256x128xf32, #tpu.memory_space<vmem>>, %arg6: memref<512x128xbf16, #tpu.memory_space<vmem>>) attributes {dimension_semantics = [#tpu.dimension_semantics<arbitrary>], iteration_bounds = array<i64: 2>, scalar_prefetch = 0 : i64, scratch_operands = 1 : i64, tpu.core_type = #tpu.core_type<tc>, window_params = [{pipeline_mode = #tpu.pipeline_mode<synchronous>, transform_indices = @transform_0, window_bounds = array<i64: 512, 64>}, {pipeline_mode = #tpu.pipeline_mode<synchronous>, transform_indices = @transform_1, window_bounds = array<i64: 64, 128>}, {transform_indices = @transform_2, window_bounds = array<i64: 256, 512>}, {pipeline_mode = #tpu.pipeline_mode<synchronous>, transform_indices = @transform_3, window_bounds = array<i64: 1, 128>}, {transform_indices = @transform_4, window_bounds = array<i64: 256, 128>}]} {
    %c0_i32 = arith.constant 0 : i32
    %0 = arith.cmpi eq, %arg0, %c0_i32 : i32
    %1 = arith.extui %0 : i1 to i32
    %c0_i32_0 = arith.constant 0 : i32
    %2 = arith.cmpi ne, %1, %c0_i32_0 : i32
    scf.if %2 {
      %c0_9 = arith.constant 0 : index
      %c0_10 = arith.constant 0 : index
      %12 = vector.load %arg1[%c0_9, %c0_10] : memref<512x64xbf16, #tpu.memory_space<vmem>>, vector<512x64xbf16>
      %c0_11 = arith.constant 0 : index
      %c0_12 = arith.constant 0 : index
      %13 = vector.load %arg2[%c0_11, %c0_12] : memref<64x128xbf16, #tpu.memory_space<vmem>>, vector<64x128xbf16>
      %cst_13 = arith.constant dense<0.000000e+00> : vector<512x128xf32>
      %14 = tpu.matmul %12, %13, %cst_13 {dimension_numbers = #tpu.dot_dimension_numbers<[1], [0], [0], [1], [0, 0, 1, 1], [], []>} : vector<512x64xbf16>, vector<64x128xbf16>, vector<512x128xf32> -> vector<512x128xf32>
      %15 = arith.truncf %14 : vector<512x128xf32> to vector<512x128xbf16>
      %c0_14 = arith.constant 0 : index
      %c0_15 = arith.constant 0 : index
      %16 = vector.load %arg6[%c0_14, %c0_15] : memref<512x128xbf16, #tpu.memory_space<vmem>>, vector<512x128xbf16>
      tpu.vector_store %arg6[%c0_14, %c0_15], %15 {strides = array<i32>} : memref<512x128xbf16, #tpu.memory_space<vmem>>, vector<512x128xbf16>,
    } else {
    }
    %c0 = arith.constant 0 : index
    %c0_1 = arith.constant 0 : index
    %3 = vector.load %arg3[%c0, %c0_1] : memref<256x512xbf16, #tpu.memory_space<vmem>>, vector<256x512xbf16>
    %c0_2 = arith.constant 0 : index
    %c0_3 = arith.constant 0 : index
    %4 = vector.load %arg6[%c0_2, %c0_3] : memref<512x128xbf16, #tpu.memory_space<vmem>>, vector<512x128xbf16>
    %cst = arith.constant dense<0.000000e+00> : vector<256x128xf32>
    %5 = tpu.matmul %3, %4, %cst {dimension_numbers = #tpu.dot_dimension_numbers<[1], [0], [0], [1], [0, 0, 1, 1], [], []>} : vector<256x512xbf16>, vector<512x128xbf16>, vector<256x128xf32> -> vector<256x128xf32>
    %c0_4 = arith.constant 0 : index
    %c0_5 = arith.constant 0 : index
    %6 = vector.load %arg4[%c0_4, %c0_5] : memref<1x128xf32, #tpu.memory_space<vmem>>, vector<1x128xf32>
    %7 = vector.broadcast %6 : vector<1x128xf32> to vector<256x128xf32>
    %8 = arith.addf %5, %7 : vector<256x128xf32>
    %cst_6 = arith.constant 0.000000e+00 : f32
    %9 = vector.broadcast %cst_6 : f32 to vector<256x128xf32>
    %10 = arith.maximumf %8, %9 : vector<256x128xf32>
    %c0_7 = arith.constant 0 : index
    %c0_8 = arith.constant 0 : index
    %11 = vector.load %arg5[%c0_7, %c0_8] : memref<256x128xf32, #tpu.memory_space<vmem>>, vector<256x128xf32>
    tpu.vector_store %arg5[%c0_7, %c0_8], %10 {strides = array<i32>} : memref<256x128xf32, #tpu.memory_space<vmem>>, vector<256x128xf32>,
    return
  }
  func.func @transform_0(%arg0: i32) -> (i32, i32) {
    %c0_i32 = arith.constant 0 : i32
    %c0_i32_0 = arith.constant 0 : i32
    %c0_i32_1 = arith.constant 0 : i32
    return %c0_i32, %c0_i32_0 : i32, i32
  }
  func.func @transform_1(%arg0: i32) -> (i32, i32) {
    %c0_i32 = arith.constant 0 : i32
    %c0_i32_0 = arith.constant 0 : i32
    %c0_i32_1 = arith.constant 0 : i32
    return %c0_i32, %c0_i32_0 : i32, i32
  }
  func.func @transform_2(%arg0: i32) -> (i32, i32) {
    %c0_i32 = arith.constant 0 : i32
    %c0_i32_0 = arith.constant 0 : i32
    return %arg0, %c0_i32 : i32, i32
  }
  func.func @transform_3(%arg0: i32) -> (i32, i32) {
    %c0_i32 = arith.constant 0 : i32
    %c0_i32_0 = arith.constant 0 : i32
    %c0_i32_1 = arith.constant 0 : i32
    return %c0_i32, %c0_i32_0 : i32, i32
  }
  func.func @transform_4(%arg0: i32) -> (i32, i32) {
    %c0_i32 = arith.constant 0 : i32
    %c0_i32_0 = arith.constant 0 : i32
    return %arg0, %c0_i32 : i32, i32
  }
}

</mosaic_0001>

<llo_original>
// kernel: tpu_custom_call.1
$region0: #{tpu_custom_call.1}
  #allocation0 [shape = 'u32[]', space=smem, size = 0x4, offset = 0x4, fixed_abs, tag = 'smem constant byte address 0x4 - core index']
  #allocation1 [shape = 'u32[144,128]{1,0:T(1,128)}', space=vmem, size = 0x12000, scoped, tag = 'internal scratch']
  #allocation2 [shape = 'bf16[512,128]{1,0:T(16,128)(2,1)}', space=vmem, size = 0x20000, scoped, tag = 'scratch operand']
  %s0 = inlined_call_operand.vmem [shape: bf16[512,64], index: 0, kind: input, shape index: {}]
  %s1 = inlined_call_operand.vmem [shape: bf16[64,128], index: 1, kind: input, shape index: {}]
  %s2 = inlined_call_operand.hbm [shape: bf16[512,512], index: 2, kind: input, shape index: {}]
  %s3 = inlined_call_operand.vmem [shape: f32[1,128], index: 3, kind: input, shape index: {}]
  %s4 = inlined_call_operand.hbm [shape: f32[512,128], index: 4, kind: output, shape index: {}]
  %s5 = sld [smem:[#allocation0]]
  $region57: #{tpu_custom_call.1} parent=0
    _
  %s7 = ssub.s32 1, %s5
  %s8 = scalar_select 0, %s7, %s5
  $region1: #{tpu_custom_call.1} parent=0
    #allocation3 [shape = 'u8[524288]{0}', space=vmem, size = 0x80000, scoped, tag = 'input window, operand 2']
    #allocation4 [shape = 's32[2]{0}', space=sflag, size = 0x8, scoped, tag = 'scoped memory for tpu_custom_call.1']
    #allocation5 [shape = 's32[2]{0}', space=sflag, size = 0x8, scoped, tag = 'scoped memory for tpu_custom_call.1']
    #allocation6 [shape = 'u8[262144]{0}', space=vmem, size = 0x40000, scoped, tag = 'output window, operand 0']
    %9 = vsyncpa [#allocation4], 0
    %s10 = scalar_lea.sflag [#allocation4], 1
    %11 = vsyncpa %s10, 0
    %12 = vsyncpa [#allocation5], 0
    %s13 = scalar_lea.sflag [#allocation5], 1
    %14 = vsyncpa %s13, 0
    loop: start=0, step=1, limit=4
    $region2: #{tpu_custom_call.1} parent=1 // loop_pre_header
      _
    $region3: #{tpu_custom_call.1} parent=1 // loop_header
      %s16 = sphi 0, %s20
      %p17 = scmp.ge.s32.totalorder %s16, 4
      %s24 = sphi 0, %s24
      %s26 = sphi 0, %s24
      %s27 = sphi 0, %s26
      %s41 = sphi 0, %s27
      %s45 = sphi 0, %s45
      %s47 = sphi 0, %s45
      %s48 = sphi 0, %s47
      %s62 = sphi 0, %s48
      %s68 = sphi 0, %s70
      %s71 = sphi 0, %s68
      %s72 = sphi 0, %s71
      %s88 = sphi 0, %s72
      %s92 = sphi 0, %s92
      %s94 = sphi 0, %s92
      %s95 = sphi 0, %s94
      %s109 = sphi 0, %s95
      %s115 = sphi 0, %s117
      %s118 = sphi 0, %s115
      %s119 = sphi 0, %s118
      %s135 = sphi 0, %s119
    $region4: #{tpu_custom_call.1} parent=1 // loop_header_branch
      %19 = sbr.rel (%p17) target = $region8
    $region5: #{tpu_custom_call.1} parent=1 // loop_body
      %s21 = ssub.s32 %s16, 1
      %s22 = ssub.s32 %s16, 2
      %s23 = sadd.s32 %s16, 1
      %s25 = sadd.s32 %s24, 1
      %p28 = scmp.eq.s32.totalorder %s16, 1
      %p29 = scmp.ne.s32.totalorder %s24, %s26
      %p30 = scmp.eq.s32.totalorder %s16, 0
      %p31 = por %p29, %p30
      %p32 = scmp.ne.s32.totalorder %s24, %s26
      %p33 = scmp.eq.s32.totalorder %s21, 1
      %p34 = por %p32, %p33
      %p35 = scmp.ne.s32.totalorder %s26, %s27
      %p36 = scmp.eq.s32.totalorder %s21, 0
      %p37 = por %p35, %p36
      %p38 = scmp.ne.s32.totalorder %s26, %s27
      %p39 = scmp.eq.s32.totalorder %s22, 1
      %p40 = por %p38, %p39
      %p42 = scmp.ne.s32.totalorder %s27, %s41
      %p43 = scmp.eq.s32.totalorder %s22, 0
      %p44 = por %p42, %p43
      %s46 = sadd.s32 %s45, 1
      %p49 = scmp.eq.s32.totalorder %s16, 1
      %p50 = scmp.ne.s32.totalorder %s45, %s47
      %p51 = scmp.eq.s32.totalorder %s16, 0
      %p52 = por %p50, %p51
      %p53 = scmp.ne.s32.totalorder %s45, %s47
      %p54 = scmp.eq.s32.totalorder %s21, 1
      %p55 = por %p53, %p54
      %p56 = scmp.ne.s32.totalorder %s47, %s48
      %p57 = scmp.eq.s32.totalorder %s21, 0
      %p58 = por %p56, %p57
      %p59 = scmp.ne.s32.totalorder %s47, %s48
      %p60 = scmp.eq.s32.totalorder %s22, 1
      %p61 = por %p59, %p60
      %p63 = scmp.ne.s32.totalorder %s48, %s62
      %p64 = scmp.eq.s32.totalorder %s22, 0
      %p65 = por %p63, %p64
      %s66 = ssub.s32 %s16, %s23
      %p67 = scmp.eq.s32.totalorder %s66, 0
      %s69 = sadd.s32 %s68, 1
      %s70 = scalar_select %p67, %s68, %s69
      %p73 = pneg %p67
      %p74 = scmp.eq.s32.totalorder %s16, 1
      %p75 = por %p73, %p74
      %p76 = scmp.ne.s32.totalorder %s68, %s71
      %p77 = scmp.eq.s32.totalorder %s16, 0
      %p78 = por %p76, %p77
      %p79 = scmp.ne.s32.totalorder %s68, %s71
      %p80 = scmp.eq.s32.totalorder %s21, 1
      %p81 = por %p79, %p80
      %p82 = scmp.ne.s32.totalorder %s71, %s72
      %p83 = scmp.eq.s32.totalorder %s21, 0
      %p84 = por %p82, %p83
      %p85 = scmp.ne.s32.totalorder %s71, %s72
      %p86 = scmp.eq.s32.totalorder %s22, 1
      %p87 = por %p85, %p86
      %p89 = scmp.ne.s32.totalorder %s72, %s88
      %p90 = scmp.eq.s32.totalorder %s22, 0
      %p91 = por %p89, %p90
      %s93 = sadd.s32 %s92, 1
      %p96 = scmp.eq.s32.totalorder %s16, 1
      %p97 = scmp.ne.s32.totalorder %s92, %s94
      %p98 = scmp.eq.s32.totalorder %s16, 0
      %p99 = por %p97, %p98
      %p100 = scmp.ne.s32.totalorder %s92, %s94
      %p101 = scmp.eq.s32.totalorder %s21, 1
      %p102 = por %p100, %p101
      %p103 = scmp.ne.s32.totalorder %s94, %s95
      %p104 = scmp.eq.s32.totalorder %s21, 0
      %p105 = por %p103, %p104
      %p106 = scmp.ne.s32.totalorder %s94, %s95
      %p107 = scmp.eq.s32.totalorder %s22, 1
      %p108 = por %p106, %p107
      %p110 = scmp.ne.s32.totalorder %s95, %s109
      %p111 = scmp.eq.s32.totalorder %s22, 0
      %p112 = por %p110, %p111
      %s113 = ssub.s32 %s16, %s23
      %p114 = scmp.eq.s32.totalorder %s113, 0
      %s116 = sadd.s32 %s115, 1
      %s117 = scalar_select %p114, %s115, %s116
      %p120 = pneg %p114
      %p121 = scmp.eq.s32.totalorder %s16, 1
      %p122 = por %p120, %p121
      %p123 = scmp.ne.s32.totalorder %s115, %s118
      %p124 = scmp.eq.s32.totalorder %s16, 0
      %p125 = por %p123, %p124
      %p126 = scmp.ne.s32.totalorder %s115, %s118
      %p127 = scmp.eq.s32.totalorder %s21, 1
      %p128 = por %p126, %p127
      %p129 = scmp.ne.s32.totalorder %s118, %s119
      %p130 = scmp.eq.s32.totalorder %s21, 0
      %p131 = por %p129, %p130
      %p132 = scmp.ne.s32.totalorder %s118, %s119
      %p133 = scmp.eq.s32.totalorder %s22, 1
      %p134 = por %p132, %p133
      %p136 = scmp.ne.s32.totalorder %s119, %s135
      %p137 = scmp.eq.s32.totalorder %s22, 0
      %p138 = por %p136, %p137
      %p139 = scmp.le.s32.totalorder 1, %s16
      %p140 = scmp.lt.s32.totalorder %s16, 3
      %p141 = pnand %p139, %p140
      %p142 = pneg %p141
      // Predicated region
      $region9: #{tpu_custom_call.1} parent=5 // pred_check
        _
      $region10: #{tpu_custom_call.1} parent=5 // pred_check_branch
        %144 = sbr.rel (%p141) target = $region12
      $region11: #{tpu_custom_call.1} parent=5 // pred_region
        %s145 = ssub.s32 %s16, 1
        // Predicated region
        $region13: #{tpu_custom_call.1} parent=11 // pred_check
          %p146 = pneg %p37
        $region14: #{tpu_custom_call.1} parent=11 // pred_check_branch
          %148 = sbr.rel (%p146) target = $region16
        $region15: #{tpu_custom_call.1} parent=11 // pred_region
          _
        $region16: #{tpu_custom_call.1} parent=11 // pred_fallthru
          _
        // Predicated region
        $region17: #{tpu_custom_call.1} parent=11 // pred_check
          %p149 = pneg %p58
        $region18: #{tpu_custom_call.1} parent=11 // pred_check_branch
          %151 = sbr.rel (%p149) target = $region20
        $region19: #{tpu_custom_call.1} parent=11 // pred_region
          _
        $region20: #{tpu_custom_call.1} parent=11 // pred_fallthru
          _
        // Predicated region
        $region21: #{tpu_custom_call.1} parent=11 // pred_check
          %p152 = pneg %p105
        $region22: #{tpu_custom_call.1} parent=11 // pred_check_branch
          %154 = sbr.rel (%p152) target = $region24
        $region23: #{tpu_custom_call.1} parent=11 // pred_region
          _
        $region24: #{tpu_custom_call.1} parent=11 // pred_fallthru
          _
      $region12: #{tpu_custom_call.1} parent=5 // pred_fallthru
        _
      %p155 = scmp.lt.s32.totalorder %s16, 2
      // Predicated region
      $region25: #{tpu_custom_call.1} parent=5 // pred_check
        %p156 = pneg %p155
      $region26: #{tpu_custom_call.1} parent=5 // pred_check_branch
        %158 = sbr.rel (%p156) target = $region28
      $region27: #{tpu_custom_call.1} parent=5 // pred_region
        // Predicated region
        $region29: #{tpu_custom_call.1} parent=27 // pred_check
          %p159 = pneg %p78
        $region30: #{tpu_custom_call.1} parent=27 // pred_check_branch
          %161 = sbr.rel (%p159) target = $region32
        $region31: #{tpu_custom_call.1} parent=27 // pred_region
          %s162 = sand.u32 %s68, 1
          %s163 = scalar_lea.sflag [#allocation4], %s162
          %s164 = sand.u32 %s68, 1
          %s165 = smul.addr %s164, 512
          %s166 = scalar_lea.vmem [#allocation3], %s165
          %s167 = smul.u32 32, %s16
          %s169 = ssub.s32 8192, 8192
          %170 = vsyncadd %s163, %s169
          %s171 = smul.addr %s167, 4
          %s172 = smul.addr %s171, 64
          %s173 = scalar_lea.hbm %s2, %s172
          %s174 = sshll.u32 %s166, 4
          %s175 = int_to_ptr.vmem [resolvable:$true] %s174
          %180 = dma.hbm_to_vmem [thread:$0]  %s173, 8192, %s175, %s163, 256, 256, 16
        $region32: #{tpu_custom_call.1} parent=27 // pred_fallthru
          _
      $region28: #{tpu_custom_call.1} parent=5 // pred_fallthru
        _
      %p181 = scmp.le.s32.totalorder 1, %s16
      %p182 = scmp.lt.s32.totalorder %s16, 3
      %p183 = pnand %p181, %p182
      %p184 = pneg %p183
      // Predicated region
      $region33: #{tpu_custom_call.1} parent=5 // pred_check
        _
      $region34: #{tpu_custom_call.1} parent=5 // pred_check_branch
        %186 = sbr.rel (%p183) target = $region36
      $region35: #{tpu_custom_call.1} parent=5 // pred_region
        %s187 = ssub.s32 %s16, 1
        %s188 = sand.u32 %s71, 1
        %s189 = scalar_lea.sflag [#allocation4], %s188
        %s190 = sand.u32 %s71, 1
        %s191 = smul.addr %s190, 512
        %s192 = scalar_lea.vmem [#allocation3], %s191
        // Predicated region
        $region37: #{tpu_custom_call.1} parent=35 // pred_check
          %p193 = pneg %p84
        $region38: #{tpu_custom_call.1} parent=35 // pred_check_branch
          %195 = sbr.rel (%p193) target = $region40
        $region39: #{tpu_custom_call.1} parent=35 // pred_region
          %196 = dma.done %s189, 8192
        $region40: #{tpu_custom_call.1} parent=35 // pred_fallthru
          _
        %p197 = pneg %p37
        %p198 = pneg %p34
        %p199 = pneg %p58
        %p200 = pneg %p55
        %s201 = sand.u32 %s71, 1
        %s202 = scalar_lea.sflag [#allocation4], %s201
        %s203 = sand.u32 %s71, 1
        %s204 = smul.addr %s203, 512
        %s205 = scalar_lea.vmem [#allocation3], %s204
        %p206 = pneg %p84
        %p207 = pneg %p81
        %p208 = pneg %p105
        %p209 = pneg %p102
        %p210 = pneg %p131
        %p211 = pneg %p128
        %s212 = sand.u32 %s118, 1
        %s213 = scalar_lea.sflag [#allocation5], %s212
        %s214 = sand.u32 %s118, 1
        %s215 = smul.addr %s214, 256
        %s216 = scalar_lea.vmem [#allocation6], %s215
        %s217 = smul.u32 32, %s21
        %s218 = smul.u32 32, %s21
        %p220 = scmp.eq.s32.totalorder %s21, 0
        // Predicated region
        $region41: #{tpu_custom_call.1} parent=35 // pred_check
          %p221 = pneg %p220
        $region42: #{tpu_custom_call.1} parent=35 // pred_check_branch
          %223 = sbr.rel (%p221) target = $region44
        $region43: #{tpu_custom_call.1} parent=35 // pred_region
          %v224 = vld [vmem:[%s0] sm:$0xf]
          %v225 = vld [vmem:[%s0 + $0x4] sm:$0xf]
          %v226 = vld [vmem:[%s0 + $0x8] sm:$0xf]
          %v227 = vld [vmem:[%s0 + $0xc] sm:$0xf]
          %v228 = vld [vmem:[%s0 + $0x10] sm:$0xf]
          %v229 = vld [vmem:[%s0 + $0x14] sm:$0xf]
          %v230 = vld [vmem:[%s0 + $0x18] sm:$0xf]
          %v231 = vld [vmem:[%s0 + $0x1c] sm:$0xf]
          %v232 = vld [vmem:[%s0 + $0x20] sm:$0xf]
          %v233 = vld [vmem:[%s0 + $0x24] sm:$0xf]
          %v234 = vld [vmem:[%s0 + $0x28] sm:$0xf]
          %v235 = vld [vmem:[%s0 + $0x2c] sm:$0xf]
          %v236 = vld [vmem:[%s0 + $0x30] sm:$0xf]
          %v237 = vld [vmem:[%s0 + $0x34] sm:$0xf]
          %v238 = vld [vmem:[%s0 + $0x38] sm:$0xf]
          %v239 = vld [vmem:[%s0 + $0x3c] sm:$0xf]
          %v240 = vld [vmem:[%s0 + $0x40] sm:$0xf]
          %v241 = vld [vmem:[%s0 + $0x44] sm:$0xf]
          %v242 = vld [vmem:[%s0 + $0x48] sm:$0xf]
          %v243 = vld [vmem:[%s0 + $0x4c] sm:$0xf]
          %v244 = vld [vmem:[%s0 + $0x50] sm:$0xf]
          %v245 = vld [vmem:[%s0 + $0x54] sm:$0xf]
          %v246 = vld [vmem:[%s0 + $0x58] sm:$0xf]
          %v247 = vld [vmem:[%s0 + $0x5c] sm:$0xf]
          %v248 = vld [vmem:[%s0 + $0x60] sm:$0xf]
          %v249 = vld [vmem:[%s0 + $0x64] sm:$0xf]
          %v250 = vld [vmem:[%s0 + $0x68] sm:$0xf]
          %v251 = vld [vmem:[%s0 + $0x6c] sm:$0xf]
          %v252 = vld [vmem:[%s0 + $0x70] sm:$0xf]
          %v253 = vld [vmem:[%s0 + $0x74] sm:$0xf]
          %v254 = vld [vmem:[%s0 + $0x78] sm:$0xf]
          %v255 = vld [vmem:[%s0 + $0x7c] sm:$0xf]
          %v256 = vld [vmem:[%s0 + $0x80] sm:$0xf]
          %v257 = vld [vmem:[%s0 + $0x84] sm:$0xf]
          %v258 = vld [vmem:[%s0 + $0x88] sm:$0xf]
          %v259 = vld [vmem:[%s0 + $0x8c] sm:$0xf]
          %v260 = vld [vmem:[%s0 + $0x90] sm:$0xf]
          %v261 = vld [vmem:[%s0 + $0x94] sm:$0xf]
          %v262 = vld [vmem:[%s0 + $0x98] sm:$0xf]
          %v263 = vld [vmem:[%s0 + $0x9c] sm:$0xf]
          %v264 = vld [vmem:[%s0 + $0xa0] sm:$0xf]
          %v265 = vld [vmem:[%s0 + $0xa4] sm:$0xf]
          %v266 = vld [vmem:[%s0 + $0xa8] sm:$0xf]
          %v267 = vld [vmem:[%s0 + $0xac] sm:$0xf]
          %v268 = vld [vmem:[%s0 + $0xb0] sm:$0xf]
          %v269 = vld [vmem:[%s0 + $0xb4] sm:$0xf]
          %v270 = vld [vmem:[%s0 + $0xb8] sm:$0xf]
          %v271 = vld [vmem:[%s0 + $0xbc] sm:$0xf]
          %v272 = vld [vmem:[%s0 + $0xc0] sm:$0xf]
          %v273 = vld [vmem:[%s0 + $0xc4] sm:$0xf]
          %v274 = vld [vmem:[%s0 + $0xc8] sm:$0xf]
          %v275 = vld [vmem:[%s0 + $0xcc] sm:$0xf]
          %v276 = vld [vmem:[%s0 + $0xd0] sm:$0xf]
          %v277 = vld [vmem:[%s0 + $0xd4] sm:$0xf]
          %v278 = vld [vmem:[%s0 + $0xd8] sm:$0xf]
          %v279 = vld [vmem:[%s0 + $0xdc] sm:$0xf]
          %v280 = vld [vmem:[%s0 + $0xe0] sm:$0xf]
          %v281 = vld [vmem:[%s0 + $0xe4] sm:$0xf]
          %v282 = vld [vmem:[%s0 + $0xe8] sm:$0xf]
          %v283 = vld [vmem:[%s0 + $0xec] sm:$0xf]
          %v284 = vld [vmem:[%s0 + $0xf0] sm:$0xf]
          %v285 = vld [vmem:[%s0 + $0xf4] sm:$0xf]
          %v286 = vld [vmem:[%s0 + $0xf8] sm:$0xf]
          %v287 = vld [vmem:[%s0 + $0xfc] sm:$0xf]
          %v288 = vld [vmem:[%s1] sm:$0xf]
          %v289 = vld [vmem:[%s1 + $0x4] sm:$0xf]
          %v290 = vld [vmem:[%s1 + $0x8] sm:$0xf]
          %v291 = vld [vmem:[%s1 + $0xc] sm:$0xf]
          %v292 = vld [vmem:[%s1 + $0x10] sm:$0xf]
          %v293 = vld [vmem:[%s1 + $0x14] sm:$0xf]
          %v294 = vld [vmem:[%s1 + $0x18] sm:$0xf]
          %v295 = vld [vmem:[%s1 + $0x1c] sm:$0xf]
          %v360 = vunpack.c.l.b16 %v224
          %v361 = vunpack.c.l.b16 %v225
          %v362 = vunpack.c.l.b16 %v226
          %v363 = vunpack.c.l.b16 %v227
          %v364 = vunpack.c.l.b16 %v228
          %v365 = vunpack.c.l.b16 %v229
          %v366 = vunpack.c.l.b16 %v230
          %v367 = vunpack.c.l.b16 %v231
          %v368 = vunpack.c.l.b16 %v232
          %v369 = vunpack.c.l.b16 %v233
          %v370 = vunpack.c.l.b16 %v234
          %v371 = vunpack.c.l.b16 %v235
          %v372 = vunpack.c.l.b16 %v236
          %v373 = vunpack.c.l.b16 %v237
          %v374 = vunpack.c.l.b16 %v238
          %v375 = vunpack.c.l.b16 %v239
          %v376 = vunpack.c.l.b16 %v240
          %v377 = vunpack.c.l.b16 %v241
          %v378 = vunpack.c.l.b16 %v242
          %v379 = vunpack.c.l.b16 %v243
          %v380 = vunpack.c.l.b16 %v244
          %v381 = vunpack.c.l.b16 %v245
          %v382 = vunpack.c.l.b16 %v246
          %v383 = vunpack.c.l.b16 %v247
          %v384 = vunpack.c.l.b16 %v248
          %v385 = vunpack.c.l.b16 %v249
          %v386 = vunpack.c.l.b16 %v250
          %v387 = vunpack.c.l.b16 %v251
          %v388 = vunpack.c.l.b16 %v252
          %v389 = vunpack.c.l.b16 %v253
          %v390 = vunpack.c.l.b16 %v254
          %v391 = vunpack.c.l.b16 %v255
          %v392 = vunpack.c.l.b16 %v256
          %v393 = vunpack.c.l.b16 %v257
          %v394 = vunpack.c.l.b16 %v258
          %v395 = vunpack.c.l.b16 %v259
          %v396 = vunpack.c.l.b16 %v260
          %v397 = vunpack.c.l.b16 %v261
          %v398 = vunpack.c.l.b16 %v262
          %v399 = vunpack.c.l.b16 %v263
          %v400 = vunpack.c.l.b16 %v264
          %v401 = vunpack.c.l.b16 %v265
          %v402 = vunpack.c.l.b16 %v266
          %v403 = vunpack.c.l.b16 %v267
          %v404 = vunpack.c.l.b16 %v268
          %v405 = vunpack.c.l.b16 %v269
          %v406 = vunpack.c.l.b16 %v270
          %v407 = vunpack.c.l.b16 %v271
          %v408 = vunpack.c.l.b16 %v272
          %v409 = vunpack.c.l.b16 %v273
          %v410 = vunpack.c.l.b16 %v274
          %v411 = vunpack.c.l.b16 %v275
          %v412 = vunpack.c.l.b16 %v276
          %v413 = vunpack.c.l.b16 %v277
          %v414 = vunpack.c.l.b16 %v278
          %v415 = vunpack.c.l.b16 %v279
          %v416 = vunpack.c.l.b16 %v280
          %v417 = vunpack.c.l.b16 %v281
          %v418 = vunpack.c.l.b16 %v282
          %v419 = vunpack.c.l.b16 %v283
          %v420 = vunpack.c.l.b16 %v284
          %v421 = vunpack.c.l.b16 %v285
          %v422 = vunpack.c.l.b16 %v286
          %v423 = vunpack.c.l.b16 %v287
          %v424 = vpack.c.b16 %v361, %v360
          %v425 = vpack.c.b16 %v363, %v362
          %v426 = vpack.c.b16 %v365, %v364
          %v427 = vpack.c.b16 %v367, %v366
          %v428 = vpack.c.b16 %v369, %v368
          %v429 = vpack.c.b16 %v371, %v370
          %v430 = vpack.c.b16 %v373, %v372
          %v431 = vpack.c.b16 %v375, %v374
          %v432 = vpack.c.b16 %v377, %v376
          %v433 = vpack.c.b16 %v379, %v378
          %v434 = vpack.c.b16 %v381, %v380
          %v435 = vpack.c.b16 %v383, %v382
          %v436 = vpack.c.b16 %v385, %v384
          %v437 = vpack.c.b16 %v387, %v386
          %v438 = vpack.c.b16 %v389, %v388
          %v439 = vpack.c.b16 %v391, %v390
          %v440 = vpack.c.b16 %v393, %v392
          %v441 = vpack.c.b16 %v395, %v394
          %v442 = vpack.c.b16 %v397, %v396
          %v443 = vpack.c.b16 %v399, %v398
          %v444 = vpack.c.b16 %v401, %v400
          %v445 = vpack.c.b16 %v403, %v402
          %v446 = vpack.c.b16 %v405, %v404
          %v447 = vpack.c.b16 %v407, %v406
          %v448 = vpack.c.b16 %v409, %v408
          %v449 = vpack.c.b16 %v411, %v410
          %v450 = vpack.c.b16 %v413, %v412
          %v451 = vpack.c.b16 %v415, %v414
          %v452 = vpack.c.b16 %v417, %v416
          %v453 = vpack.c.b16 %v419, %v418
          %v454 = vpack.c.b16 %v421, %v420
          %v455 = vpack.c.b16 %v423, %v422
          %v464 = vunpack.c.l.b16 %v288
          %v465 = vunpack.c.l.b16 %v289
          %v466 = vunpack.c.l.b16 %v290
          %v467 = vunpack.c.l.b16 %v291
          %v468 = vunpack.c.l.b16 %v292
          %v469 = vunpack.c.l.b16 %v293
          %v470 = vunpack.c.l.b16 %v294
          %v471 = vunpack.c.l.b16 %v295
          %v472 = vpack.c.b16 %v465, %v464
          %v473 = vpack.c.b16 %v467, %v466
          %v474 = vpack.c.b16 %v469, %v468
          %v475 = vpack.c.b16 %v471, %v470
          %vm480 = vcmask 523264
          %v482 = vsel %vm480, %v424, 0
          %v485 = vsel %vm480, %v425, 0
          %v488 = vsel %vm480, %v426, 0
          %v491 = vsel %vm480, %v427, 0
          %v494 = vsel %vm480, %v428, 0
          %v497 = vsel %vm480, %v429, 0
          %v500 = vsel %vm480, %v430, 0
          %v503 = vsel %vm480, %v431, 0
          %v506 = vsel %vm480, %v432, 0
          %v509 = vsel %vm480, %v433, 0
          %v512 = vsel %vm480, %v434, 0
          %v515 = vsel %vm480, %v435, 0
          %v518 = vsel %vm480, %v436, 0
          %v521 = vsel %vm480, %v437, 0
          %v524 = vsel %vm480, %v438, 0
          %v527 = vsel %vm480, %v439, 0
          %v530 = vsel %vm480, %v440, 0
          %v533 = vsel %vm480, %v441, 0
          %v536 = vsel %vm480, %v442, 0
          %v539 = vsel %vm480, %v443, 0
          %v542 = vsel %vm480, %v444, 0
          %v545 = vsel %vm480, %v445, 0
          %v548 = vsel %vm480, %v446, 0
          %v551 = vsel %vm480, %v447, 0
          %v554 = vsel %vm480, %v448, 0
          %v557 = vsel %vm480, %v449, 0
          %v560 = vsel %vm480, %v450, 0
          %v563 = vsel %vm480, %v451, 0
          %v566 = vsel %vm480, %v452, 0
          %v569 = vsel %vm480, %v453, 0
          %v572 = vsel %vm480, %v454, 0
          %v575 = vsel %vm480, %v455, 0
          %577 = vmatprep.subr.bf16.mxu0 0
          %578 = vmatpush1.bf16.msra.mxu0 %v472
          %579 = vmatprep.subr.bf16.mxu0 0
          %580 = vmatpush1.bf16.msra.mxu0 %v473
          %581 = vmatprep.subr.bf16.mxu0 0
          %582 = vmatpush1.bf16.msra.mxu0 %v474
          %583 = vmatprep.subr.bf16.mxu0 0
          %584 = vmatpush1.bf16.msra.mxu0 %v475
          %585 = vmatprep.subr.bf16.mxu0 0
          %586 = vmatpush1.bf16.msra.mxu0 0
          %587 = vmatprep.subr.bf16.mxu0 0
          %588 = vmatpush1.bf16.msra.mxu0 0
          %589 = vmatprep.subr.bf16.mxu0 0
          %590 = vmatpush1.bf16.msra.mxu0 0
          %591 = vmatprep.subr.bf16.mxu0 0
          %592 = vmatpush1.bf16.msra.mxu0 0
          %593 = vmatprep.subr.bf16.mxu0 0
          %594 = vmatpush1.bf16.msra.mxu0 0
          %595 = vmatprep.subr.bf16.mxu0 0
          %596 = vmatpush1.bf16.msra.mxu0 0
          %597 = vmatprep.subr.bf16.mxu0 0
          %598 = vmatpush1.bf16.msra.mxu0 0
          %599 = vmatprep.subr.bf16.mxu0 0
          %600 = vmatpush1.bf16.msra.mxu0 0
          %601 = vmatprep.subr.bf16.mxu0 0
          %602 = vmatpush1.bf16.msra.mxu0 0
          %603 = vmatprep.subr.bf16.mxu0 0
          %604 = vmatpush1.bf16.msra.mxu0 0
          %605 = vmatprep.subr.bf16.mxu0 0
          %606 = vmatpush1.bf16.msra.mxu0 0
          %607 = vmatprep.subr.bf16.mxu0 0
          %608 = vmatpush1.bf16.msra.mxu0 0
          %609 = vmatprep.mubr.bf16.mxu0 0
          %610 = vmatmul.mubr.bf16.gmra.mrb[0].mxu0 %v482
          %v611 = vpop.f32.mrb[0].mxu0
          %v612 = vadd.f32 0.0, %v611
          %v613 = vpop.f32.mrb[0].mxu0
          %v614 = vpop.f32.mrb[0].mxu0
          %v615 = vadd.f32 0.0, %v614
          %v616 = vpop.f32.mrb[0].mxu0
          %617 = vmatprep.mubr.bf16.mxu0 0
          %618 = vmatmul.mubr.bf16.gmra.mrb[0].mxu0 %v485
          %v619 = vpop.f32.mrb[0].mxu0
          %v620 = vadd.f32 0.0, %v619
          %v621 = vpop.f32.mrb[0].mxu0
          %v622 = vpop.f32.mrb[0].mxu0
          %v623 = vadd.f32 0.0, %v622
          %v624 = vpop.f32.mrb[0].mxu0
          %625 = vmatprep.mubr.bf16.mxu0 0
          %626 = vmatmul.mubr.bf16.gmra.mrb[0].mxu0 %v488
          %v627 = vpop.f32.mrb[0].mxu0
          %v628 = vadd.f32 0.0, %v627
          %v629 = vpop.f32.mrb[0].mxu0
          %v630 = vpop.f32.mrb[0].mxu0
          %v631 = vadd.f32 0.0, %v630
          %v632 = vpop.f32.mrb[0].mxu0
          %633 = vmatprep.mubr.bf16.mxu0 0
          %634 = vmatmul.mubr.bf16.gmra.mrb[0].mxu0 %v491
          %v635 = vpop.f32.mrb[0].mxu0
          %v636 = vadd.f32 0.0, %v635
          %v637 = vpop.f32.mrb[0].mxu0
          %v638 = vpop.f32.mrb[0].mxu0
          %v639 = vadd.f32 0.0, %v638
          %v640 = vpop.f32.mrb[0].mxu0
          %641 = vmatprep.mubr.bf16.mxu0 0
          %642 = vmatmul.mubr.bf16.gmra.mrb[0].mxu0 %v494
          %v643 = vpop.f32.mrb[0].mxu0
          %v644 = vadd.f32 0.0, %v643
          %v645 = vpop.f32.mrb[0].mxu0
          %v646 = vpop.f32.mrb[0].mxu0
          %v647 = vadd.f32 0.0, %v646
          %v648 = vpop.f32.mrb[0].mxu0
          %649 = vmatprep.mubr.bf16.mxu0 0
          %650 = vmatmul.mubr.bf16.gmra.mrb[0].mxu0 %v497
          %v651 = vpop.f32.mrb[0].mxu0
          %v652 = vadd.f32 0.0, %v651
          %v653 = vpop.f32.mrb[0].mxu0
          %v654 = vpop.f32.mrb[0].mxu0
          %v655 = vadd.f32 0.0, %v654
          %v656 = vpop.f32.mrb[0].mxu0
          %657 = vmatprep.mubr.bf16.mxu0 0
          %658 = vmatmul.mubr.bf16.gmra.mrb[0].mxu0 %v500
          %v659 = vpop.f32.mrb[0].mxu0
          %v660 = vadd.f32 0.0, %v659
          %v661 = vpop.f32.mrb[0].mxu0
          %v662 = vpop.f32.mrb[0].mxu0
          %v663 = vadd.f32 0.0, %v662
          %v664 = vpop.f32.mrb[0].mxu0
          %665 = vmatprep.mubr.bf16.mxu0 0
          %666 = vmatmul.mubr.bf16.gmra.mrb[0].mxu0 %v503
          %v667 = vpop.f32.mrb[0].mxu0
          %v668 = vadd.f32 0.0, %v667
          %v669 = vpop.f32.mrb[0].mxu0
          %v670 = vpop.f32.mrb[0].mxu0
          %v671 = vadd.f32 0.0, %v670
          %v672 = vpop.f32.mrb[0].mxu0
          %673 = vmatprep.mubr.bf16.mxu0 0
          %674 = vmatmul.mubr.bf16.gmra.mrb[0].mxu0 %v506
          %v675 = vpop.f32.mrb[0].mxu0
          %v676 = vadd.f32 0.0, %v675
          %v677 = vpop.f32.mrb[0].mxu0
          %v678 = vpop.f32.mrb[0].mxu0
          %v679 = vadd.f32 0.0, %v678
          %v680 = vpop.f32.mrb[0].mxu0
          %681 = vmatprep.mubr.bf16.mxu0 0
          %682 = vmatmul.mubr.bf16.gmra.mrb[0].mxu0 %v509
          %v683 = vpop.f32.mrb[0].mxu0
          %v684 = vadd.f32 0.0, %v683
          %v685 = vpop.f32.mrb[0].mxu0
          %v686 = vpop.f32.mrb[0].mxu0
          %v687 = vadd.f32 0.0, %v686
          %v688 = vpop.f32.mrb[0].mxu0
          %689 = vmatprep.mubr.bf16.mxu0 0
          %690 = vmatmul.mubr.bf16.gmra.mrb[0].mxu0 %v512
          %v691 = vpop.f32.mrb[0].mxu0
          %v692 = vadd.f32 0.0, %v691
          %v693 = vpop.f32.mrb[0].mxu0
          %v694 = vpop.f32.mrb[0].mxu0
          %v695 = vadd.f32 0.0, %v694
          %v696 = vpop.f32.mrb[0].mxu0
          %697 = vmatprep.mubr.bf16.mxu0 0
          %698 = vmatmul.mubr.bf16.gmra.mrb[0].mxu0 %v515
          %v699 = vpop.f32.mrb[0].mxu0
          %v700 = vadd.f32 0.0, %v699
          %v701 = vpop.f32.mrb[0].mxu0
          %v702 = vpop.f32.mrb[0].mxu0
          %v703 = vadd.f32 0.0, %v702
          %v704 = vpop.f32.mrb[0].mxu0
          %705 = vmatprep.mubr.bf16.mxu0 0
          %706 = vmatmul.mubr.bf16.gmra.mrb[0].mxu0 %v518
          %v707 = vpop.f32.mrb[0].mxu0
          %v708 = vadd.f32 0.0, %v707
          %v709 = vpop.f32.mrb[0].mxu0
          %v710 = vpop.f32.mrb[0].mxu0
          %v711 = vadd.f32 0.0, %v710
          %v712 = vpop.f32.mrb[0].mxu0
          %713 = vmatprep.mubr.bf16.mxu0 0
          %714 = vmatmul.mubr.bf16.gmra.mrb[0].mxu0 %v521
          %v715 = vpop.f32.mrb[0].mxu0
          %v716 = vadd.f32 0.0, %v715
          %v717 = vpop.f32.mrb[0].mxu0
          %v718 = vpop.f32.mrb[0].mxu0
          %v719 = vadd.f32 0.0, %v718
          %v720 = vpop.f32.mrb[0].mxu0
          %721 = vmatprep.mubr.bf16.mxu0 0
          %722 = vmatmul.mubr.bf16.gmra.mrb[0].mxu0 %v524
          %v723 = vpop.f32.mrb[0].mxu0
          %v724 = vadd.f32 0.0, %v723
          %v725 = vpop.f32.mrb[0].mxu0
          %v726 = vpop.f32.mrb[0].mxu0
          %v727 = vadd.f32 0.0, %v726
          %v728 = vpop.f32.mrb[0].mxu0
          %729 = vmatprep.mubr.bf16.mxu0 0
          %730 = vmatmul.mubr.bf16.gmra.mrb[0].mxu0 %v527
          %v731 = vpop.f32.mrb[0].mxu0
          %v732 = vadd.f32 0.0, %v731
          %v733 = vpop.f32.mrb[0].mxu0
          %v734 = vpop.f32.mrb[0].mxu0
          %v735 = vadd.f32 0.0, %v734
          %v736 = vpop.f32.mrb[0].mxu0
          %737 = vmatprep.mubr.bf16.mxu0 0
          %738 = vmatmul.mubr.bf16.gmra.mrb[0].mxu0 %v530
          %v739 = vpop.f32.mrb[0].mxu0
          %v740 = vadd.f32 0.0, %v739
          %v741 = vpop.f32.mrb[0].mxu0
          %v742 = vpop.f32.mrb[0].mxu0
          %v743 = vadd.f32 0.0, %v742
          %v744 = vpop.f32.mrb[0].mxu0
          %745 = vmatprep.mubr.bf16.mxu0 0
          %746 = vmatmul.mubr.bf16.gmra.mrb[0].mxu0 %v533
          %v747 = vpop.f32.mrb[0].mxu0
          %v748 = vadd.f32 0.0, %v747
          %v749 = vpop.f32.mrb[0].mxu0
          %v750 = vpop.f32.mrb[0].mxu0
          %v751 = vadd.f32 0.0, %v750
          %v752 = vpop.f32.mrb[0].mxu0
          %753 = vmatprep.mubr.bf16.mxu0 0
          %754 = vmatmul.mubr.bf16.gmra.mrb[0].mxu0 %v536
          %v755 = vpop.f32.mrb[0].mxu0
          %v756 = vadd.f32 0.0, %v755
          %v757 = vpop.f32.mrb[0].mxu0
          %v758 = vpop.f32.mrb[0].mxu0
          %v759 = vadd.f32 0.0, %v758
          %v760 = vpop.f32.mrb[0].mxu0
          %761 = vmatprep.mubr.bf16.mxu0 0
          %762 = vmatmul.mubr.bf16.gmra.mrb[0].mxu0 %v539
          %v763 = vpop.f32.mrb[0].mxu0
          %v764 = vadd.f32 0.0, %v763
          %v765 = vpop.f32.mrb[0].mxu0
          %v766 = vpop.f32.mrb[0].mxu0
          %v767 = vadd.f32 0.0, %v766
          %v768 = vpop.f32.mrb[0].mxu0
          %769 = vmatprep.mubr.bf16.mxu0 0
          %770 = vmatmul.mubr.bf16.gmra.mrb[0].mxu0 %v542
          %v771 = vpop.f32.mrb[0].mxu0
          %v772 = vadd.f32 0.0, %v771
          %v773 = vpop.f32.mrb[0].mxu0
          %v774 = vpop.f32.mrb[0].mxu0
          %v775 = vadd.f32 0.0, %v774
          %v776 = vpop.f32.mrb[0].mxu0
          %777 = vmatprep.mubr.bf16.mxu0 0
          %778 = vmatmul.mubr.bf16.gmra.mrb[0].mxu0 %v545
          %v779 = vpop.f32.mrb[0].mxu0
          %v780 = vadd.f32 0.0, %v779
          %v781 = vpop.f32.mrb[0].mxu0
          %v782 = vpop.f32.mrb[0].mxu0
          %v783 = vadd.f32 0.0, %v782
          %v784 = vpop.f32.mrb[0].mxu0
          %785 = vmatprep.mubr.bf16.mxu0 0
          %786 = vmatmul.mubr.bf16.gmra.mrb[0].mxu0 %v548
          %v787 = vpop.f32.mrb[0].mxu0
          %v788 = vadd.f32 0.0, %v787
          %v789 = vpop.f32.mrb[0].mxu0
          %v790 = vpop.f32.mrb[0].mxu0
          %v791 = vadd.f32 0.0, %v790
          %v792 = vpop.f32.mrb[0].mxu0
          %793 = vmatprep.mubr.bf16.mxu0 0
          %794 = vmatmul.mubr.bf16.gmra.mrb[0].mxu0 %v551
          %v795 = vpop.f32.mrb[0].mxu0
          %v796 = vadd.f32 0.0, %v795
          %v797 = vpop.f32.mrb[0].mxu0
          %v798 = vpop.f32.mrb[0].mxu0
          %v799 = vadd.f32 0.0, %v798
          %v800 = vpop.f32.mrb[0].mxu0
          %801 = vmatprep.mubr.bf16.mxu0 0
          %802 = vmatmul.mubr.bf16.gmra.mrb[0].mxu0 %v554
          %v803 = vpop.f32.mrb[0].mxu0
          %v804 = vadd.f32 0.0, %v803
          %v805 = vpop.f32.mrb[0].mxu0
          %v806 = vpop.f32.mrb[0].mxu0
          %v807 = vadd.f32 0.0, %v806
          %v808 = vpop.f32.mrb[0].mxu0
          %809 = vmatprep.mubr.bf16.mxu0 0
          %810 = vmatmul.mubr.bf16.gmra.mrb[0].mxu0 %v557
          %v811 = vpop.f32.mrb[0].mxu0
          %v812 = vadd.f32 0.0, %v811
          %v813 = vpop.f32.mrb[0].mxu0
          %v814 = vpop.f32.mrb[0].mxu0
          %v815 = vadd.f32 0.0, %v814
          %v816 = vpop.f32.mrb[0].mxu0
          %817 = vmatprep.mubr.bf16.mxu0 0
          %818 = vmatmul.mubr.bf16.gmra.mrb[0].mxu0 %v560
          %v819 = vpop.f32.mrb[0].mxu0
          %v820 = vadd.f32 0.0, %v819
          %v821 = vpop.f32.mrb[0].mxu0
          %v822 = vpop.f32.mrb[0].mxu0
          %v823 = vadd.f32 0.0, %v822
          %v824 = vpop.f32.mrb[0].mxu0
          %825 = vmatprep.mubr.bf16.mxu0 0
          %826 = vmatmul.mubr.bf16.gmra.mrb[0].mxu0 %v563
          %v827 = vpop.f32.mrb[0].mxu0
          %v828 = vadd.f32 0.0, %v827
          %v829 = vpop.f32.mrb[0].mxu0
          %v830 = vpop.f32.mrb[0].mxu0
          %v831 = vadd.f32 0.0, %v830
          %v832 = vpop.f32.mrb[0].mxu0
          %833 = vmatprep.mubr.bf16.mxu0 0
          %834 = vmatmul.mubr.bf16.gmra.mrb[0].mxu0 %v566
          %v835 = vpop.f32.mrb[0].mxu0
          %v836 = vadd.f32 0.0, %v835
          %v837 = vpop.f32.mrb[0].mxu0
          %v838 = vpop.f32.mrb[0].mxu0
          %v839 = vadd.f32 0.0, %v838
          %v840 = vpop.f32.mrb[0].mxu0
          %841 = vmatprep.mubr.bf16.mxu0 0
          %842 = vmatmul.mubr.bf16.gmra.mrb[0].mxu0 %v569
          %v843 = vpop.f32.mrb[0].mxu0
          %v844 = vadd.f32 0.0, %v843
          %v845 = vpop.f32.mrb[0].mxu0
          %v846 = vpop.f32.mrb[0].mxu0
          %v847 = vadd.f32 0.0, %v846
          %v848 = vpop.f32.mrb[0].mxu0
          %849 = vmatprep.mubr.bf16.mxu0 0
          %850 = vmatmul.mubr.bf16.gmra.mrb[0].mxu0 %v572
          %v851 = vpop.f32.mrb[0].mxu0
          %v852 = vadd.f32 0.0, %v851
          %v853 = vpop.f32.mrb[0].mxu0
          %v854 = vpop.f32.mrb[0].mxu0
          %v855 = vadd.f32 0.0, %v854
          %v856 = vpop.f32.mrb[0].mxu0
          %857 = vmatprep.mubr.bf16.mxu0 0
          %858 = vmatmul.mubr.bf16.gmra.mrb[0].mxu0 %v575
          %v859 = vpop.f32.mrb[0].mxu0
          %v860 = vadd.f32 0.0, %v859
          %v861 = vpop.f32.mrb[0].mxu0
          %v862 = vpop.f32.mrb[0].mxu0
          %v863 = vadd.f32 0.0, %v862
          %v864 = vpop.f32.mrb[0].mxu0
          %865 = vdwg.mxu0
          %v866 = vpack.c.bf16 %v615, %v612
          %v867 = vpack.c.bf16 %v623, %v620
          %v868 = vpack.c.bf16 %v631, %v628
          %v869 = vpack.c.bf16 %v639, %v636
          %v870 = vpack.c.bf16 %v647, %v644
          %v871 = vpack.c.bf16 %v655, %v652
          %v872 = vpack.c.bf16 %v663, %v660
          %v873 = vpack.c.bf16 %v671, %v668
          %v874 = vpack.c.bf16 %v679, %v676
          %v875 = vpack.c.bf16 %v687, %v684
          %v876 = vpack.c.bf16 %v695, %v692
          %v877 = vpack.c.bf16 %v703, %v700
          %v878 = vpack.c.bf16 %v711, %v708
          %v879 = vpack.c.bf16 %v719, %v716
          %v880 = vpack.c.bf16 %v727, %v724
          %v881 = vpack.c.bf16 %v735, %v732
          %v882 = vpack.c.bf16 %v743, %v740
          %v883 = vpack.c.bf16 %v751, %v748
          %v884 = vpack.c.bf16 %v759, %v756
          %v885 = vpack.c.bf16 %v767, %v764
          %v886 = vpack.c.bf16 %v775, %v772
          %v887 = vpack.c.bf16 %v783, %v780
          %v888 = vpack.c.bf16 %v791, %v788
          %v889 = vpack.c.bf16 %v799, %v796
          %v890 = vpack.c.bf16 %v807, %v804
          %v891 = vpack.c.bf16 %v815, %v812
          %v892 = vpack.c.bf16 %v823, %v820
          %v893 = vpack.c.bf16 %v831, %v828
          %v894 = vpack.c.bf16 %v839, %v836
          %v895 = vpack.c.bf16 %v847, %v844
          %v896 = vpack.c.bf16 %v855, %v852
          %v897 = vpack.c.bf16 %v863, %v860
          %898 = vst [vmem:[#allocation2] sm:$0xff] %v866
          %899 = vst [vmem:[#allocation2 + $0x8] sm:$0xff] %v867
          %900 = vst [vmem:[#allocation2 + $0x10] sm:$0xff] %v868
          %901 = vst [vmem:[#allocation2 + $0x18] sm:$0xff] %v869
          %902 = vst [vmem:[#allocation2 + $0x20] sm:$0xff] %v870
          %903 = vst [vmem:[#allocation2 + $0x28] sm:$0xff] %v871
          %904 = vst [vmem:[#allocation2 + $0x30] sm:$0xff] %v872
          %905 = vst [vmem:[#allocation2 + $0x38] sm:$0xff] %v873
          %906 = vst [vmem:[#allocation2 + $0x40] sm:$0xff] %v874
          %907 = vst [vmem:[#allocation2 + $0x48] sm:$0xff] %v875
          %908 = vst [vmem:[#allocation2 + $0x50] sm:$0xff] %v876
          %909 = vst [vmem:[#allocation2 + $0x58] sm:$0xff] %v877
          %910 = vst [vmem:[#allocation2 + $0x60] sm:$0xff] %v878
          %911 = vst [vmem:[#allocation2 + $0x68] sm:$0xff] %v879
          %912 = vst [vmem:[#allocation2 + $0x70] sm:$0xff] %v880
          %913 = vst [vmem:[#allocation2 + $0x78] sm:$0xff] %v881
          %914 = vst [vmem:[#allocation2 + $0x80] sm:$0xff] %v882
          %915 = vst [vmem:[#allocation2 + $0x88] sm:$0xff] %v883
          %916 = vst [vmem:[#allocation2 + $0x90] sm:$0xff] %v884
          %917 = vst [vmem:[#allocation2 + $0x98] sm:$0xff] %v885
          %918 = vst [vmem:[#allocation2 + $0xa0] sm:$0xff] %v886
          %919 = vst [vmem:[#allocation2 + $0xa8] sm:$0xff] %v887
          %920 = vst [vmem:[#allocation2 + $0xb0] sm:$0xff] %v888
          %921 = vst [vmem:[#allocation2 + $0xb8] sm:$0xff] %v889
          %922 = vst [vmem:[#allocation2 + $0xc0] sm:$0xff] %v890
          %923 = vst [vmem:[#allocation2 + $0xc8] sm:$0xff] %v891
          %924 = vst [vmem:[#allocation2 + $0xd0] sm:$0xff] %v892
          %925 = vst [vmem:[#allocation2 + $0xd8] sm:$0xff] %v893
          %926 = vst [vmem:[#allocation2 + $0xe0] sm:$0xff] %v894
          %927 = vst [vmem:[#allocation2 + $0xe8] sm:$0xff] %v895
          %928 = vst [vmem:[#allocation2 + $0xf0] sm:$0xff] %v896
          %929 = vst [vmem:[#allocation2 + $0xf8] sm:$0xff] %v897
        $region44: #{tpu_custom_call.1} parent=35 // pred_fallthru
          _
        %v930 = vld [vmem:[%s192] sm:$0xff]
        %v931 = vld [vmem:[%s192 + $0x8] sm:$0xff]
        %v932 = vld [vmem:[%s192 + $0x10] sm:$0xff]
        %v933 = vld [vmem:[%s192 + $0x18] sm:$0xff]
        %v934 = vld [vmem:[%s192 + $0x20] sm:$0xff]
        %v935 = vld [vmem:[%s192 + $0x28] sm:$0xff]
        %v936 = vld [vmem:[%s192 + $0x30] sm:$0xff]
        %v937 = vld [vmem:[%s192 + $0x38] sm:$0xff]
        %v938 = vld [vmem:[%s192 + $0x40] sm:$0xff]
        %v939 = vld [vmem:[%s192 + $0x48] sm:$0xff]
        %v940 = vld [vmem:[%s192 + $0x50] sm:$0xff]
        %v941 = vld [vmem:[%s192 + $0x58] sm:$0xff]
        %v942 = vld [vmem:[%s192 + $0x60] sm:$0xff]
        %v943 = vld [vmem:[%s192 + $0x68] sm:$0xff]
        %v944 = vld [vmem:[%s192 + $0x70] sm:$0xff]
        %v945 = vld [vmem:[%s192 + $0x78] sm:$0xff]
        %v946 = vld [vmem:[%s192 + $0x80] sm:$0xff]
        %v947 = vld [vmem:[%s192 + $0x88] sm:$0xff]
        %v948 = vld [vmem:[%s192 + $0x90] sm:$0xff]
        %v949 = vld [vmem:[%s192 + $0x98] sm:$0xff]
        %v950 = vld [vmem:[%s192 + $0xa0] sm:$0xff]
        %v951 = vld [vmem:[%s192 + $0xa8] sm:$0xff]
        %v952 = vld [vmem:[%s192 + $0xb0] sm:$0xff]
        %v953 = vld [vmem:[%s192 + $0xb8] sm:$0xff]
        %v954 = vld [vmem:[%s192 + $0xc0] sm:$0xff]
        %v955 = vld [vmem:[%s192 + $0xc8] sm:$0xff]
        %v956 = vld [vmem:[%s192 + $0xd0] sm:$0xff]
        %v957 = vld [vmem:[%s192 + $0xd8] sm:$0xff]
        %v958 = vld [vmem:[%s192 + $0xe0] sm:$0xff]
        %v959 = vld [vmem:[%s192 + $0xe8] sm:$0xff]
        %v960 = vld [vmem:[%s192 + $0xf0] sm:$0xff]
        %v961 = vld [vmem:[%s192 + $0xf8] sm:$0xff]
        %v962 = vld [vmem:[%s192 + $0x100] sm:$0xff]
        %v963 = vld [vmem:[%s192 + $0x108] sm:$0xff]
        %v964 = vld [vmem:[%s192 + $0x110] sm:$0xff]
        %v965 = vld [vmem:[%s192 + $0x118] sm:$0xff]
        %v966 = vld [vmem:[%s192 + $0x120] sm:$0xff]
        %v967 = vld [vmem:[%s192 + $0x128] sm:$0xff]
        %v968 = vld [vmem:[%s192 + $0x130] sm:$0xff]
        %v969 = vld [vmem:[%s192 + $0x138] sm:$0xff]
        %v970 = vld [vmem:[%s192 + $0x140] sm:$0xff]
        %v971 = vld [vmem:[%s192 + $0x148] sm:$0xff]
        %v972 = vld [vmem:[%s192 + $0x150] sm:$0xff]
        %v973 = vld [vmem:[%s192 + $0x158] sm:$0xff]
        %v974 = vld [vmem:[%s192 + $0x160] sm:$0xff]
        %v975 = vld [vmem:[%s192 + $0x168] sm:$0xff]
        %v976 = vld [vmem:[%s192 + $0x170] sm:$0xff]
        %v977 = vld [vmem:[%s192 + $0x178] sm:$0xff]
        %v978 = vld [vmem:[%s192 + $0x180] sm:$0xff]
        %v979 = vld [vmem:[%s192 + $0x188] sm:$0xff]
        %v980 = vld [vmem:[%s192 + $0x190] sm:$0xff]
        %v981 = vld [vmem:[%s192 + $0x198] sm:$0xff]
        %v982 = vld [vmem:[%s192 + $0x1a0] sm:$0xff]
        %v983 = vld [vmem:[%s192 + $0x1a8] sm:$0xff]
        %v984 = vld [vmem:[%s192 + $0x1b0] sm:$0xff]
        %v985 = vld [vmem:[%s192 + $0x1b8] sm:$0xff]
        %v986 = vld [vmem:[%s192 + $0x1c0] sm:$0xff]
        %v987 = vld [vmem:[%s192 + $0x1c8] sm:$0xff]
        %v988 = vld [vmem:[%s192 + $0x1d0] sm:$0xff]
        %v989 = vld [vmem:[%s192 + $0x1d8] sm:$0xff]
        %v990 = vld [vmem:[%s192 + $0x1e0] sm:$0xff]
        %v991 = vld [vmem:[%s192 + $0x1e8] sm:$0xff]
        %v992 = vld [vmem:[%s192 + $0x1f0] sm:$0xff]
        %v993 = vld [vmem:[%s192 + $0x1f8] sm:$0xff]
        %v994 = vld [vmem:[#allocation2] sm:$0xff]
        %v995 = vld [vmem:[#allocation2 + $0x8] sm:$0xff]
        %v996 = vld [vmem:[#allocation2 + $0x10] sm:$0xff]
        %v997 = vld [vmem:[#allocation2 + $0x18] sm:$0xff]
        %v998 = vld [vmem:[#allocation2 + $0x20] sm:$0xff]
        %v999 = vld [vmem:[#allocation2 + $0x28] sm:$0xff]
        %v1000 = vld [vmem:[#allocation2 + $0x30] sm:$0xff]
        %v1001 = vld [vmem:[#allocation2 + $0x38] sm:$0xff]
        %v1002 = vld [vmem:[#allocation2 + $0x40] sm:$0xff]
        %v1003 = vld [vmem:[#allocation2 + $0x48] sm:$0xff]
        %v1004 = vld [vmem:[#allocation2 + $0x50] sm:$0xff]
        %v1005 = vld [vmem:[#allocation2 + $0x58] sm:$0xff]
        %v1006 = vld [vmem:[#allocation2 + $0x60] sm:$0xff]
        %v1007 = vld [vmem:[#allocation2 + $0x68] sm:$0xff]
        %v1008 = vld [vmem:[#allocation2 + $0x70] sm:$0xff]
        %v1009 = vld [vmem:[#allocation2 + $0x78] sm:$0xff]
        %v1010 = vld [vmem:[#allocation2 + $0x80] sm:$0xff]
        %v1011 = vld [vmem:[#allocation2 + $0x88] sm:$0xff]
        %v1012 = vld [vmem:[#allocation2 + $0x90] sm:$0xff]
        %v1013 = vld [vmem:[#allocation2 + $0x98] sm:$0xff]
        %v1014 = vld [vmem:[#allocation2 + $0xa0] sm:$0xff]
        %v1015 = vld [vmem:[#allocation2 + $0xa8] sm:$0xff]
        %v1016 = vld [vmem:[#allocation2 + $0xb0] sm:$0xff]
        %v1017 = vld [vmem:[#allocation2 + $0xb8] sm:$0xff]
        %v1018 = vld [vmem:[#allocation2 + $0xc0] sm:$0xff]
        %v1019 = vld [vmem:[#allocation2 + $0xc8] sm:$0xff]
        %v1020 = vld [vmem:[#allocation2 + $0xd0] sm:$0xff]
        %v1021 = vld [vmem:[#allocation2 + $0xd8] sm:$0xff]
        %v1022 = vld [vmem:[#allocation2 + $0xe0] sm:$0xff]
        %v1023 = vld [vmem:[#allocation2 + $0xe8] sm:$0xff]
        %v1024 = vld [vmem:[#allocation2 + $0xf0] sm:$0xff]
        %v1025 = vld [vmem:[#allocation2 + $0xf8] sm:$0xff]
        %v1026 = vld [vmem:[%s3] sm:$0x1]
        %v1028 = vlaneseq
        %v1029 = vshrl.u32 %v1028, 7
        %v1030 = vsub.s32 0, %v1029
        %v1031 = vrot.slane %v1026, %v1030
        %v1097 = vunpack.c.l.b16 %v930
        %v1098 = vunpack.c.h.b16 %v930
        %v1099 = vunpack.c.l.b16 %v931
        %v1100 = vunpack.c.h.b16 %v931
        %v1101 = vunpack.c.l.b16 %v932
        %v1102 = vunpack.c.h.b16 %v932
        %v1103 = vunpack.c.l.b16 %v933
        %v1104 = vunpack.c.h.b16 %v933
        %v1105 = vunpack.c.l.b16 %v934
        %v1106 = vunpack.c.h.b16 %v934
        %v1107 = vunpack.c.l.b16 %v935
        %v1108 = vunpack.c.h.b16 %v935
        %v1109 = vunpack.c.l.b16 %v936
        %v1110 = vunpack.c.h.b16 %v936
        %v1111 = vunpack.c.l.b16 %v937
        %v1112 = vunpack.c.h.b16 %v937
        %v1113 = vunpack.c.l.b16 %v938
        %v1114 = vunpack.c.h.b16 %v938
        %v1115 = vunpack.c.l.b16 %v939
        %v1116 = vunpack.c.h.b16 %v939
        %v1117 = vunpack.c.l.b16 %v940
        %v1118 = vunpack.c.h.b16 %v940
        %v1119 = vunpack.c.l.b16 %v941
        %v1120 = vunpack.c.h.b16 %v941
        %v1121 = vunpack.c.l.b16 %v942
        %v1122 = vunpack.c.h.b16 %v942
        %v1123 = vunpack.c.l.b16 %v943
        %v1124 = vunpack.c.h.b16 %v943
        %v1125 = vunpack.c.l.b16 %v944
        %v1126 = vunpack.c.h.b16 %v944
        %v1127 = vunpack.c.l.b16 %v945
        %v1128 = vunpack.c.h.b16 %v945
        %v1129 = vunpack.c.l.b16 %v946
        %v1130 = vunpack.c.h.b16 %v946
        %v1131 = vunpack.c.l.b16 %v947
        %v1132 = vunpack.c.h.b16 %v947
        %v1133 = vunpack.c.l.b16 %v948
        %v1134 = vunpack.c.h.b16 %v948
        %v1135 = vunpack.c.l.b16 %v949
        %v1136 = vunpack.c.h.b16 %v949
        %v1137 = vunpack.c.l.b16 %v950
        %v1138 = vunpack.c.h.b16 %v950
        %v1139 = vunpack.c.l.b16 %v951
        %v1140 = vunpack.c.h.b16 %v951
        %v1141 = vunpack.c.l.b16 %v952
        %v1142 = vunpack.c.h.b16 %v952
        %v1143 = vunpack.c.l.b16 %v953
        %v1144 = vunpack.c.h.b16 %v953
        %v1145 = vunpack.c.l.b16 %v954
        %v1146 = vunpack.c.h.b16 %v954
        %v1147 = vunpack.c.l.b16 %v955
        %v1148 = vunpack.c.h.b16 %v955
        %v1149 = vunpack.c.l.b16 %v956
        %v1150 = vunpack.c.h.b16 %v956
        %v1151 = vunpack.c.l.b16 %v957
        %v1152 = vunpack.c.h.b16 %v957
        %v1153 = vunpack.c.l.b16 %v958
        %v1154 = vunpack.c.h.b16 %v958
        %v1155 = vunpack.c.l.b16 %v959
        %v1156 = vunpack.c.h.b16 %v959
        %v1157 = vunpack.c.l.b16 %v960
        %v1158 = vunpack.c.h.b16 %v960
        %v1159 = vunpack.c.l.b16 %v961
        %v1160 = vunpack.c.h.b16 %v961
        %v1161 = vunpack.c.l.b16 %v962
        %v1162 = vunpack.c.h.b16 %v962
        %v1163 = vunpack.c.l.b16 %v963
        %v1164 = vunpack.c.h.b16 %v963
        %v1165 = vunpack.c.l.b16 %v964
        %v1166 = vunpack.c.h.b16 %v964
        %v1167 = vunpack.c.l.b16 %v965
        %v1168 = vunpack.c.h.b16 %v965
        %v1169 = vunpack.c.l.b16 %v966
        %v1170 = vunpack.c.h.b16 %v966
        %v1171 = vunpack.c.l.b16 %v967
        %v1172 = vunpack.c.h.b16 %v967
        %v1173 = vunpack.c.l.b16 %v968
        %v1174 = vunpack.c.h.b16 %v968
        %v1175 = vunpack.c.l.b16 %v969
        %v1176 = vunpack.c.h.b16 %v969
        %v1177 = vunpack.c.l.b16 %v970
        %v1178 = vunpack.c.h.b16 %v970
        %v1179 = vunpack.c.l.b16 %v971
        %v1180 = vunpack.c.h.b16 %v971
        %v1181 = vunpack.c.l.b16 %v972
        %v1182 = vunpack.c.h.b16 %v972
        %v1183 = vunpack.c.l.b16 %v973
        %v1184 = vunpack.c.h.b16 %v973
        %v1185 = vunpack.c.l.b16 %v974
        %v1186 = vunpack.c.h.b16 %v974
        %v1187 = vunpack.c.l.b16 %v975
        %v1188 = vunpack.c.h.b16 %v975
        %v1189 = vunpack.c.l.b16 %v976
        %v1190 = vunpack.c.h.b16 %v976
        %v1191 = vunpack.c.l.b16 %v977
        %v1192 = vunpack.c.h.b16 %v977
        %v1193 = vunpack.c.l.b16 %v978
        %v1194 = vunpack.c.h.b16 %v978
        %v1195 = vunpack.c.l.b16 %v979
        %v1196 = vunpack.c.h.b16 %v979
        %v1197 = vunpack.c.l.b16 %v980
        %v1198 = vunpack.c.h.b16 %v980
        %v1199 = vunpack.c.l.b16 %v981
        %v1200 = vunpack.c.h.b16 %v981
        %v1201 = vunpack.c.l.b16 %v982
        %v1202 = vunpack.c.h.b16 %v982
        %v1203 = vunpack.c.l.b16 %v983
        %v1204 = vunpack.c.h.b16 %v983
        %v1205 = vunpack.c.l.b16 %v984
        %v1206 = vunpack.c.h.b16 %v984
        %v1207 = vunpack.c.l.b16 %v985
        %v1208 = vunpack.c.h.b16 %v985
        %v1209 = vunpack.c.l.b16 %v986
        %v1210 = vunpack.c.h.b16 %v986
        %v1211 = vunpack.c.l.b16 %v987
        %v1212 = vunpack.c.h.b16 %v987
        %v1213 = vunpack.c.l.b16 %v988
        %v1214 = vunpack.c.h.b16 %v988
        %v1215 = vunpack.c.l.b16 %v989
        %v1216 = vunpack.c.h.b16 %v989
        %v1217 = vunpack.c.l.b16 %v990
        %v1218 = vunpack.c.h.b16 %v990
        %v1219 = vunpack.c.l.b16 %v991
        %v1220 = vunpack.c.h.b16 %v991
        %v1221 = vunpack.c.l.b16 %v992
        %v1222 = vunpack.c.h.b16 %v992
        %v1223 = vunpack.c.l.b16 %v993
        %v1224 = vunpack.c.h.b16 %v993
        %v1225 = vpack.c.b16 %v1101, %v1097
        %v1226 = vpack.c.b16 %v1102, %v1098
        %v1227 = vpack.c.b16 %v1103, %v1099
        %v1228 = vpack.c.b16 %v1104, %v1100
        %v1229 = vpack.c.b16 %v1109, %v1105
        %v1230 = vpack.c.b16 %v1110, %v1106
        %v1231 = vpack.c.b16 %v1111, %v1107
        %v1232 = vpack.c.b16 %v1112, %v1108
        %v1233 = vpack.c.b16 %v1117, %v1113
        %v1234 = vpack.c.b16 %v1118, %v1114
        %v1235 = vpack.c.b16 %v1119, %v1115
        %v1236 = vpack.c.b16 %v1120, %v1116
        %v1237 = vpack.c.b16 %v1125, %v1121
        %v1238 = vpack.c.b16 %v1126, %v1122
        %v1239 = vpack.c.b16 %v1127, %v1123
        %v1240 = vpack.c.b16 %v1128, %v1124
        %v1241 = vpack.c.b16 %v1133, %v1129
        %v1242 = vpack.c.b16 %v1134, %v1130
        %v1243 = vpack.c.b16 %v1135, %v1131
        %v1244 = vpack.c.b16 %v1136, %v1132
        %v1245 = vpack.c.b16 %v1141, %v1137
        %v1246 = vpack.c.b16 %v1142, %v1138
        %v1247 = vpack.c.b16 %v1143, %v1139
        %v1248 = vpack.c.b16 %v1144, %v1140
        %v1249 = vpack.c.b16 %v1149, %v1145
        %v1250 = vpack.c.b16 %v1150, %v1146
        %v1251 = vpack.c.b16 %v1151, %v1147
        %v1252 = vpack.c.b16 %v1152, %v1148
        %v1253 = vpack.c.b16 %v1157, %v1153
        %v1254 = vpack.c.b16 %v1158, %v1154
        %v1255 = vpack.c.b16 %v1159, %v1155
        %v1256 = vpack.c.b16 %v1160, %v1156
        %v1257 = vpack.c.b16 %v1165, %v1161
        %v1258 = vpack.c.b16 %v1166, %v1162
        %v1259 = vpack.c.b16 %v1167, %v1163
        %v1260 = vpack.c.b16 %v1168, %v1164
        %v1261 = vpack.c.b16 %v1173, %v1169
        %v1262 = vpack.c.b16 %v1174, %v1170
        %v1263 = vpack.c.b16 %v1175, %v1171
        %v1264 = vpack.c.b16 %v1176, %v1172
        %v1265 = vpack.c.b16 %v1181, %v1177
        %v1266 = vpack.c.b16 %v1182, %v1178
        %v1267 = vpack.c.b16 %v1183, %v1179
        %v1268 = vpack.c.b16 %v1184, %v1180
        %v1269 = vpack.c.b16 %v1189, %v1185
        %v1270 = vpack.c.b16 %v1190, %v1186
        %v1271 = vpack.c.b16 %v1191, %v1187
        %v1272 = vpack.c.b16 %v1192, %v1188
        %v1273 = vpack.c.b16 %v1197, %v1193
        %v1274 = vpack.c.b16 %v1198, %v1194
        %v1275 = vpack.c.b16 %v1199, %v1195
        %v1276 = vpack.c.b16 %v1200, %v1196
        %v1277 = vpack.c.b16 %v1205, %v1201
        %v1278 = vpack.c.b16 %v1206, %v1202
        %v1279 = vpack.c.b16 %v1207, %v1203
        %v1280 = vpack.c.b16 %v1208, %v1204
        %v1281 = vpack.c.b16 %v1213, %v1209
        %v1282 = vpack.c.b16 %v1214, %v1210
        %v1283 = vpack.c.b16 %v1215, %v1211
        %v1284 = vpack.c.b16 %v1216, %v1212
        %v1285 = vpack.c.b16 %v1221, %v1217
        %v1286 = vpack.c.b16 %v1222, %v1218
        %v1287 = vpack.c.b16 %v1223, %v1219
        %v1288 = vpack.c.b16 %v1224, %v1220
        %1353 = vmatprep.subr.bf16.mxu0 0
        %1354 = vmatpush1.bf16.msra.mxu0 %v994
        %1355 = vmatprep.subr.bf16.mxu0 0
        %1356 = vmatpush1.bf16.msra.mxu0 %v995
        %1357 = vmatprep.subr.bf16.mxu0 0
        %1358 = vmatpush1.bf16.msra.mxu0 %v996
        %1359 = vmatprep.subr.bf16.mxu0 0
        %1360 = vmatpush1.bf16.msra.mxu0 %v997
        %1361 = vmatprep.subr.bf16.mxu0 0
        %1362 = vmatpush1.bf16.msra.mxu0 %v998
        %1363 = vmatprep.subr.bf16.mxu0 0
        %1364 = vmatpush1.bf16.msra.mxu0 %v999
        %1365 = vmatprep.subr.bf16.mxu0 0
        %1366 = vmatpush1.bf16.msra.mxu0 %v1000
        %1367 = vmatprep.subr.bf16.mxu0 0
        %1368 = vmatpush1.bf16.msra.mxu0 %v1001
        %1369 = vmatprep.subr.bf16.mxu0 0
        %1370 = vmatpush1.bf16.msra.mxu0 %v1002
        %1371 = vmatprep.subr.bf16.mxu0 0
        %1372 = vmatpush1.bf16.msra.mxu0 %v1003
        %1373 = vmatprep.subr.bf16.mxu0 0
        %1374 = vmatpush1.bf16.msra.mxu0 %v1004
        %1375 = vmatprep.subr.bf16.mxu0 0
        %1376 = vmatpush1.bf16.msra.mxu0 %v1005
        %1377 = vmatprep.subr.bf16.mxu0 0
        %1378 = vmatpush1.bf16.msra.mxu0 %v1006
        %1379 = vmatprep.subr.bf16.mxu0 0
        %1380 = vmatpush1.bf16.msra.mxu0 %v1007
        %1381 = vmatprep.subr.bf16.mxu0 0
        %1382 = vmatpush1.bf16.msra.mxu0 %v1008
        %1383 = vmatprep.subr.bf16.mxu0 0
        %1384 = vmatpush1.bf16.msra.mxu0 %v1009
        %1385 = vmatprep.mubr.bf16.mxu0 %v1226
        %1386 = vmatmul.mubr.bf16.gmra.mrb[0].mxu0 %v1225
        %v1387 = vpop.f32.mrb[0].mxu0
        %v1388 = vadd.f32 %v1031, %v1387
        %v1389 = vpop.f32.mrb[0].mxu0
        %v1390 = vpop.f32.mrb[0].mxu0
        %v1391 = vadd.f32 %v1031, %v1390
        %v1392 = vpop.f32.mrb[0].mxu0
        %1393 = vmatprep.mubr.bf16.mxu0 %v1230
        %1394 = vmatmul.mubr.bf16.gmra.mrb[0].mxu0 %v1229
        %v1395 = vpop.f32.mrb[0].mxu0
        %v1396 = vadd.f32 %v1031, %v1395
        %v1397 = vpop.f32.mrb[0].mxu0
        %v1398 = vpop.f32.mrb[0].mxu0
        %v1399 = vadd.f32 %v1031, %v1398
        %v1400 = vpop.f32.mrb[0].mxu0
        %1401 = vmatprep.mubr.bf16.mxu0 %v1234
        %1402 = vmatmul.mubr.bf16.gmra.mrb[0].mxu0 %v1233
        %v1403 = vpop.f32.mrb[0].mxu0
        %v1404 = vadd.f32 %v1031, %v1403
        %v1405 = vpop.f32.mrb[0].mxu0
        %v1406 = vpop.f32.mrb[0].mxu0
        %v1407 = vadd.f32 %v1031, %v1406
        %v1408 = vpop.f32.mrb[0].mxu0
        %1409 = vmatprep.mubr.bf16.mxu0 %v1238
        %1410 = vmatmul.mubr.bf16.gmra.mrb[0].mxu0 %v1237
        %v1411 = vpop.f32.mrb[0].mxu0
        %v1412 = vadd.f32 %v1031, %v1411
        %v1413 = vpop.f32.mrb[0].mxu0
        %v1414 = vpop.f32.mrb[0].mxu0
        %v1415 = vadd.f32 %v1031, %v1414
        %v1416 = vpop.f32.mrb[0].mxu0
        %1417 = vmatprep.mubr.bf16.mxu0 %v1242
        %1418 = vmatmul.mubr.bf16.gmra.mrb[0].mxu0 %v1241
        %v1419 = vpop.f32.mrb[0].mxu0
        %v1420 = vadd.f32 %v1031, %v1419
        %v1421 = vpop.f32.mrb[0].mxu0
        %v1422 = vpop.f32.mrb[0].mxu0
        %v1423 = vadd.f32 %v1031, %v1422
        %v1424 = vpop.f32.mrb[0].mxu0
        %1425 = vmatprep.mubr.bf16.mxu0 %v1246
        %1426 = vmatmul.mubr.bf16.gmra.mrb[0].mxu0 %v1245
        %v1427 = vpop.f32.mrb[0].mxu0
        %v1428 = vadd.f32 %v1031, %v1427
        %v1429 = vpop.f32.mrb[0].mxu0
        %v1430 = vpop.f32.mrb[0].mxu0
        %v1431 = vadd.f32 %v1031, %v1430
        %v1432 = vpop.f32.mrb[0].mxu0
        %1433 = vmatprep.mubr.bf16.mxu0 %v1250
        %1434 = vmatmul.mubr.bf16.gmra.mrb[0].mxu0 %v1249
        %v1435 = vpop.f32.mrb[0].mxu0
        %v1436 = vadd.f32 %v1031, %v1435
        %v1437 = vpop.f32.mrb[0].mxu0
        %v1438 = vpop.f32.mrb[0].mxu0
        %v1439 = vadd.f32 %v1031, %v1438
        %v1440 = vpop.f32.mrb[0].mxu0
        %1441 = vmatprep.mubr.bf16.mxu0 %v1254
        %1442 = vmatmul.mubr.bf16.gmra.mrb[0].mxu0 %v1253
        %v1443 = vpop.f32.mrb[0].mxu0
        %v1444 = vadd.f32 %v1031, %v1443
        %v1445 = vpop.f32.mrb[0].mxu0
        %v1446 = vpop.f32.mrb[0].mxu0
        %v1447 = vadd.f32 %v1031, %v1446
        %v1448 = vpop.f32.mrb[0].mxu0
        %1449 = vmatprep.mubr.bf16.mxu0 %v1258
        %1450 = vmatmul.mubr.bf16.gmra.mrb[0].mxu0 %v1257
        %v1451 = vpop.f32.mrb[0].mxu0
        %v1452 = vadd.f32 %v1031, %v1451
        %v1453 = vpop.f32.mrb[0].mxu0
        %v1454 = vpop.f32.mrb[0].mxu0
        %v1455 = vadd.f32 %v1031, %v1454
        %v1456 = vpop.f32.mrb[0].mxu0
        %1457 = vmatprep.mubr.bf16.mxu0 %v1262
        %1458 = vmatmul.mubr.bf16.gmra.mrb[0].mxu0 %v1261
        %v1459 = vpop.f32.mrb[0].mxu0
        %v1460 = vadd.f32 %v1031, %v1459
        %v1461 = vpop.f32.mrb[0].mxu0
        %v1462 = vpop.f32.mrb[0].mxu0
        %v1463 = vadd.f32 %v1031, %v1462
        %v1464 = vpop.f32.mrb[0].mxu0
        %1465 = vmatprep.mubr.bf16.mxu0 %v1266
        %1466 = vmatmul.mubr.bf16.gmra.mrb[0].mxu0 %v1265
        %v1467 = vpop.f32.mrb[0].mxu0
        %v1468 = vadd.f32 %v1031, %v1467
        %v1469 = vpop.f32.mrb[0].mxu0
        %v1470 = vpop.f32.mrb[0].mxu0
        %v1471 = vadd.f32 %v1031, %v1470
        %v1472 = vpop.f32.mrb[0].mxu0
        %1473 = vmatprep.mubr.bf16.mxu0 %v1270
        %1474 = vmatmul.mubr.bf16.gmra.mrb[0].mxu0 %v1269
        %v1475 = vpop.f32.mrb[0].mxu0
        %v1476 = vadd.f32 %v1031, %v1475
        %v1477 = vpop.f32.mrb[0].mxu0
        %v1478 = vpop.f32.mrb[0].mxu0
        %v1479 = vadd.f32 %v1031, %v1478
        %v1480 = vpop.f32.mrb[0].mxu0
        %1481 = vmatprep.mubr.bf16.mxu0 %v1274
        %1482 = vmatmul.mubr.bf16.gmra.mrb[0].mxu0 %v1273
        %v1483 = vpop.f32.mrb[0].mxu0
        %v1484 = vadd.f32 %v1031, %v1483
        %v1485 = vpop.f32.mrb[0].mxu0
        %v1486 = vpop.f32.mrb[0].mxu0
        %v1487 = vadd.f32 %v1031, %v1486
        %v1488 = vpop.f32.mrb[0].mxu0
        %1489 = vmatprep.mubr.bf16.mxu0 %v1278
        %1490 = vmatmul.mubr.bf16.gmra.mrb[0].mxu0 %v1277
        %v1491 = vpop.f32.mrb[0].mxu0
        %v1492 = vadd.f32 %v1031, %v1491
        %v1493 = vpop.f32.mrb[0].mxu0
        %v1494 = vpop.f32.mrb[0].mxu0
        %v1495 = vadd.f32 %v1031, %v1494
        %v1496 = vpop.f32.mrb[0].mxu0
        %1497 = vmatprep.mubr.bf16.mxu0 %v1282
        %1498 = vmatmul.mubr.bf16.gmra.mrb[0].mxu0 %v1281
        %v1499 = vpop.f32.mrb[0].mxu0
        %v1500 = vadd.f32 %v1031, %v1499
        %v1501 = vpop.f32.mrb[0].mxu0
        %v1502 = vpop.f32.mrb[0].mxu0
        %v1503 = vadd.f32 %v1031, %v1502
        %v1504 = vpop.f32.mrb[0].mxu0
        %1505 = vmatprep.mubr.bf16.mxu0 %v1286
        %1506 = vmatmul.mubr.bf16.gmra.mrb[0].mxu0 %v1285
        %v1507 = vpop.f32.mrb[0].mxu0
        %v1508 = vadd.f32 %v1031, %v1507
        %v1509 = vpop.f32.mrb[0].mxu0
        %v1510 = vpop.f32.mrb[0].mxu0
        %v1511 = vadd.f32 %v1031, %v1510
        %v1512 = vpop.f32.mrb[0].mxu0
        %1513 = vdwg.mxu0
        %1514 = vmatprep.subr.bf16.mxu0 0
        %1515 = vmatpush1.bf16.msra.mxu0 %v1010
        %1516 = vmatprep.subr.bf16.mxu0 0
        %1517 = vmatpush1.bf16.msra.mxu0 %v1011
        %1518 = vmatprep.subr.bf16.mxu0 0
        %1519 = vmatpush1.bf16.msra.mxu0 %v1012
        %1520 = vmatprep.subr.bf16.mxu0 0
        %1521 = vmatpush1.bf16.msra.mxu0 %v1013
        %1522 = vmatprep.subr.bf16.mxu0 0
        %1523 = vmatpush1.bf16.msra.mxu0 %v1014
        %1524 = vmatprep.subr.bf16.mxu0 0
        %1525 = vmatpush1.bf16.msra.mxu0 %v1015
        %1526 = vmatprep.subr.bf16.mxu0 0
        %1527 = vmatpush1.bf16.msra.mxu0 %v1016
        %1528 = vmatprep.subr.bf16.mxu0 0
        %1529 = vmatpush1.bf16.msra.mxu0 %v1017
        %1530 = vmatprep.subr.bf16.mxu0 0
        %1531 = vmatpush1.bf16.msra.mxu0 %v1018
        %1532 = vmatprep.subr.bf16.mxu0 0
        %1533 = vmatpush1.bf16.msra.mxu0 %v1019
        %1534 = vmatprep.subr.bf16.mxu0 0
        %1535 = vmatpush1.bf16.msra.mxu0 %v1020
        %1536 = vmatprep.subr.bf16.mxu0 0
        %1537 = vmatpush1.bf16.msra.mxu0 %v1021
        %1538 = vmatprep.subr.bf16.mxu0 0
        %1539 = vmatpush1.bf16.msra.mxu0 %v1022
        %1540 = vmatprep.subr.bf16.mxu0 0
        %1541 = vmatpush1.bf16.msra.mxu0 %v1023
        %1542 = vmatprep.subr.bf16.mxu0 0
        %1543 = vmatpush1.bf16.msra.mxu0 %v1024
        %1544 = vmatprep.subr.bf16.mxu0 0
        %1545 = vmatpush1.bf16.msra.mxu0 %v1025
        %1546 = vmatprep.mubr.bf16.mxu0 %v1228
        %1547 = vmatmul.mubr.bf16.gmra.mrb[0].mxu0 %v1227
        %v1548 = vpop.f32.mrb[0].mxu0
        %v1549 = vadd.f32 %v1388, %v1548
        %v1550 = vpop.f32.mrb[0].mxu0
        %v1551 = vpop.f32.mrb[0].mxu0
        %v1552 = vadd.f32 %v1391, %v1551
        %v1553 = vpop.f32.mrb[0].mxu0
        %1554 = vmatprep.mubr.bf16.mxu0 %v1232
        %1555 = vmatmul.mubr.bf16.gmra.mrb[0].mxu0 %v1231
        %v1556 = vpop.f32.mrb[0].mxu0
        %v1557 = vadd.f32 %v1396, %v1556
        %v1558 = vpop.f32.mrb[0].mxu0
        %v1559 = vpop.f32.mrb[0].mxu0
        %v1560 = vadd.f32 %v1399, %v1559
        %v1561 = vpop.f32.mrb[0].mxu0
        %1562 = vmatprep.mubr.bf16.mxu0 %v1236
        %1563 = vmatmul.mubr.bf16.gmra.mrb[0].mxu0 %v1235
        %v1564 = vpop.f32.mrb[0].mxu0
        %v1565 = vadd.f32 %v1404, %v1564
        %v1566 = vpop.f32.mrb[0].mxu0
        %v1567 = vpop.f32.mrb[0].mxu0
        %v1568 = vadd.f32 %v1407, %v1567
        %v1569 = vpop.f32.mrb[0].mxu0
        %1570 = vmatprep.mubr.bf16.mxu0 %v1240
        %1571 = vmatmul.mubr.bf16.gmra.mrb[0].mxu0 %v1239
        %v1572 = vpop.f32.mrb[0].mxu0
        %v1573 = vadd.f32 %v1412, %v1572
        %v1574 = vpop.f32.mrb[0].mxu0
        %v1575 = vpop.f32.mrb[0].mxu0
        %v1576 = vadd.f32 %v1415, %v1575
        %v1577 = vpop.f32.mrb[0].mxu0
        %1578 = vmatprep.mubr.bf16.mxu0 %v1244
        %1579 = vmatmul.mubr.bf16.gmra.mrb[0].mxu0 %v1243
        %v1580 = vpop.f32.mrb[0].mxu0
        %v1581 = vadd.f32 %v1420, %v1580
        %v1582 = vpop.f32.mrb[0].mxu0
        %v1583 = vpop.f32.mrb[0].mxu0
        %v1584 = vadd.f32 %v1423, %v1583
        %v1585 = vpop.f32.mrb[0].mxu0
        %1586 = vmatprep.mubr.bf16.mxu0 %v1248
        %1587 = vmatmul.mubr.bf16.gmra.mrb[0].mxu0 %v1247
        %v1588 = vpop.f32.mrb[0].mxu0
        %v1589 = vadd.f32 %v1428, %v1588
        %v1590 = vpop.f32.mrb[0].mxu0
        %v1591 = vpop.f32.mrb[0].mxu0
        %v1592 = vadd.f32 %v1431, %v1591
        %v1593 = vpop.f32.mrb[0].mxu0
        %1594 = vmatprep.mubr.bf16.mxu0 %v1252
        %1595 = vmatmul.mubr.bf16.gmra.mrb[0].mxu0 %v1251
        %v1596 = vpop.f32.mrb[0].mxu0
        %v1597 = vadd.f32 %v1436, %v1596
        %v1598 = vpop.f32.mrb[0].mxu0
        %v1599 = vpop.f32.mrb[0].mxu0
        %v1600 = vadd.f32 %v1439, %v1599
        %v1601 = vpop.f32.mrb[0].mxu0
        %1602 = vmatprep.mubr.bf16.mxu0 %v1256
        %1603 = vmatmul.mubr.bf16.gmra.mrb[0].mxu0 %v1255
        %v1604 = vpop.f32.mrb[0].mxu0
        %v1605 = vadd.f32 %v1444, %v1604
        %v1606 = vpop.f32.mrb[0].mxu0
        %v1607 = vpop.f32.mrb[0].mxu0
        %v1608 = vadd.f32 %v1447, %v1607
        %v1609 = vpop.f32.mrb[0].mxu0
        %1610 = vmatprep.mubr.bf16.mxu0 %v1260
        %1611 = vmatmul.mubr.bf16.gmra.mrb[0].mxu0 %v1259
        %v1612 = vpop.f32.mrb[0].mxu0
        %v1613 = vadd.f32 %v1452, %v1612
        %v1614 = vpop.f32.mrb[0].mxu0
        %v1615 = vpop.f32.mrb[0].mxu0
        %v1616 = vadd.f32 %v1455, %v1615
        %v1617 = vpop.f32.mrb[0].mxu0
        %1618 = vmatprep.mubr.bf16.mxu0 %v1264
        %1619 = vmatmul.mubr.bf16.gmra.mrb[0].mxu0 %v1263
        %v1620 = vpop.f32.mrb[0].mxu0
        %v1621 = vadd.f32 %v1460, %v1620
        %v1622 = vpop.f32.mrb[0].mxu0
        %v1623 = vpop.f32.mrb[0].mxu0
        %v1624 = vadd.f32 %v1463, %v1623
        %v1625 = vpop.f32.mrb[0].mxu0
        %1626 = vmatprep.mubr.bf16.mxu0 %v1268
        %1627 = vmatmul.mubr.bf16.gmra.mrb[0].mxu0 %v1267
        %v1628 = vpop.f32.mrb[0].mxu0
        %v1629 = vadd.f32 %v1468, %v1628
        %v1630 = vpop.f32.mrb[0].mxu0
        %v1631 = vpop.f32.mrb[0].mxu0
        %v1632 = vadd.f32 %v1471, %v1631
        %v1633 = vpop.f32.mrb[0].mxu0
        %1634 = vmatprep.mubr.bf16.mxu0 %v1272
        %1635 = vmatmul.mubr.bf16.gmra.mrb[0].mxu0 %v1271
        %v1636 = vpop.f32.mrb[0].mxu0
        %v1637 = vadd.f32 %v1476, %v1636
        %v1638 = vpop.f32.mrb[0].mxu0
        %v1639 = vpop.f32.mrb[0].mxu0
        %v1640 = vadd.f32 %v1479, %v1639
        %v1641 = vpop.f32.mrb[0].mxu0
        %1642 = vmatprep.mubr.bf16.mxu0 %v1276
        %1643 = vmatmul.mubr.bf16.gmra.mrb[0].mxu0 %v1275
        %v1644 = vpop.f32.mrb[0].mxu0
        %v1645 = vadd.f32 %v1484, %v1644
        %v1646 = vpop.f32.mrb[0].mxu0
        %v1647 = vpop.f32.mrb[0].mxu0
        %v1648 = vadd.f32 %v1487, %v1647
        %v1649 = vpop.f32.mrb[0].mxu0
        %1650 = vmatprep.mubr.bf16.mxu0 %v1280
        %1651 = vmatmul.mubr.bf16.gmra.mrb[0].mxu0 %v1279
        %v1652 = vpop.f32.mrb[0].mxu0
        %v1653 = vadd.f32 %v1492, %v1652
        %v1654 = vpop.f32.mrb[0].mxu0
        %v1655 = vpop.f32.mrb[0].mxu0
        %v1656 = vadd.f32 %v1495, %v1655
        %v1657 = vpop.f32.mrb[0].mxu0
        %1658 = vmatprep.mubr.bf16.mxu0 %v1284
        %1659 = vmatmul.mubr.bf16.gmra.mrb[0].mxu0 %v1283
        %v1660 = vpop.f32.mrb[0].mxu0
        %v1661 = vadd.f32 %v1500, %v1660
        %v1662 = vpop.f32.mrb[0].mxu0
        %v1663 = vpop.f32.mrb[0].mxu0
        %v1664 = vadd.f32 %v1503, %v1663
        %v1665 = vpop.f32.mrb[0].mxu0
        %1666 = vmatprep.mubr.bf16.mxu0 %v1288
        %1667 = vmatmul.mubr.bf16.gmra.mrb[0].mxu0 %v1287
        %v1668 = vpop.f32.mrb[0].mxu0
        %v1669 = vadd.f32 %v1508, %v1668
        %v1670 = vpop.f32.mrb[0].mxu0
        %v1671 = vpop.f32.mrb[0].mxu0
        %v1672 = vadd.f32 %v1511, %v1671
        %v1673 = vpop.f32.mrb[0].mxu0
        %1674 = vdwg.mxu0
        %v1675 = vmax.f32 %v1549, 0.0
        %v1676 = vmax.f32 %v1552, 0.0
        %v1677 = vmax.f32 %v1557, 0.0
        %v1678 = vmax.f32 %v1560, 0.0
        %v1679 = vmax.f32 %v1565, 0.0
        %v1680 = vmax.f32 %v1568, 0.0
        %v1681 = vmax.f32 %v1573, 0.0
        %v1682 = vmax.f32 %v1576, 0.0
        %v1683 = vmax.f32 %v1581, 0.0
        %v1684 = vmax.f32 %v1584, 0.0
        %v1685 = vmax.f32 %v1589, 0.0
        %v1686 = vmax.f32 %v1592, 0.0
        %v1687 = vmax.f32 %v1597, 0.0
        %v1688 = vmax.f32 %v1600, 0.0
        %v1689 = vmax.f32 %v1605, 0.0
        %v1690 = vmax.f32 %v1608, 0.0
        %v1691 = vmax.f32 %v1613, 0.0
        %v1692 = vmax.f32 %v1616, 0.0
        %v1693 = vmax.f32 %v1621, 0.0
        %v1694 = vmax.f32 %v1624, 0.0
        %v1695 = vmax.f32 %v1629, 0.0
        %v1696 = vmax.f32 %v1632, 0.0
        %v1697 = vmax.f32 %v1637, 0.0
        %v1698 = vmax.f32 %v1640, 0.0
        %v1699 = vmax.f32 %v1645, 0.0
        %v1700 = vmax.f32 %v1648, 0.0
        %v1701 = vmax.f32 %v1653, 0.0
        %v1702 = vmax.f32 %v1656, 0.0
        %v1703 = vmax.f32 %v1661, 0.0
        %v1704 = vmax.f32 %v1664, 0.0
        %v1705 = vmax.f32 %v1669, 0.0
        %v1706 = vmax.f32 %v1672, 0.0
        %1707 = vst [vmem:[%s216] sm:$0xff] %v1675
        %1708 = vst [vmem:[%s216 + $0x8] sm:$0xff] %v1676
        %1709 = vst [vmem:[%s216 + $0x10] sm:$0xff] %v1677
        %1710 = vst [vmem:[%s216 + $0x18] sm:$0xff] %v1678
        %1711 = vst [vmem:[%s216 + $0x20] sm:$0xff] %v1679
        %1712 = vst [vmem:[%s216 + $0x28] sm:$0xff] %v1680
        %1713 = vst [vmem:[%s216 + $0x30] sm:$0xff] %v1681
        %1714 = vst [vmem:[%s216 + $0x38] sm:$0xff] %v1682
        %1715 = vst [vmem:[%s216 + $0x40] sm:$0xff] %v1683
        %1716 = vst [vmem:[%s216 + $0x48] sm:$0xff] %v1684
        %1717 = vst [vmem:[%s216 + $0x50] sm:$0xff] %v1685
        %1718 = vst [vmem:[%s216 + $0x58] sm:$0xff] %v1686
        %1719 = vst [vmem:[%s216 + $0x60] sm:$0xff] %v1687
        %1720 = vst [vmem:[%s216 + $0x68] sm:$0xff] %v1688
        %1721 = vst [vmem:[%s216 + $0x70] sm:$0xff] %v1689
        %1722 = vst [vmem:[%s216 + $0x78] sm:$0xff] %v1690
        %1723 = vst [vmem:[%s216 + $0x80] sm:$0xff] %v1691
        %1724 = vst [vmem:[%s216 + $0x88] sm:$0xff] %v1692
        %1725 = vst [vmem:[%s216 + $0x90] sm:$0xff] %v1693
        %1726 = vst [vmem:[%s216 + $0x98] sm:$0xff] %v1694
        %1727 = vst [vmem:[%s216 + $0xa0] sm:$0xff] %v1695
        %1728 = vst [vmem:[%s216 + $0xa8] sm:$0xff] %v1696
        %1729 = vst [vmem:[%s216 + $0xb0] sm:$0xff] %v1697
        %1730 = vst [vmem:[%s216 + $0xb8] sm:$0xff] %v1698
        %1731 = vst [vmem:[%s216 + $0xc0] sm:$0xff] %v1699
        %1732 = vst [vmem:[%s216 + $0xc8] sm:$0xff] %v1700
        %1733 = vst [vmem:[%s216 + $0xd0] sm:$0xff] %v1701
        %1734 = vst [vmem:[%s216 + $0xd8] sm:$0xff] %v1702
        %1735 = vst [vmem:[%s216 + $0xe0] sm:$0xff] %v1703
        %1736 = vst [vmem:[%s216 + $0xe8] sm:$0xff] %v1704
        %1737 = vst [vmem:[%s216 + $0xf0] sm:$0xff] %v1705
        %1738 = vst [vmem:[%s216 + $0xf8] sm:$0xff] %v1706
        %s1739 = sand.u32 %s118, 1
        %s1740 = scalar_lea.sflag [#allocation5], %s1739
        %s1741 = sand.u32 %s118, 1
        %s1742 = smul.addr %s1741, 256
        %s1743 = scalar_lea.vmem [#allocation6], %s1742
        // Predicated region
        $region45: #{tpu_custom_call.1} parent=35 // pred_check
          %p1744 = pneg %p128
        $region46: #{tpu_custom_call.1} parent=35 // pred_check_branch
          %1746 = sbr.rel (%p1744) target = $region48
        $region47: #{tpu_custom_call.1} parent=35 // pred_region
          %s1747 = smul.u32 32, %s21
          %s1749 = ssub.s32 4096, 4096
          %1750 = vsyncadd %s1740, %s1749
          %s1751 = smul.addr %s1747, 128
          %s1752 = scalar_lea.hbm %s4, %s1751
          %s1753 = sshll.u32 %s1743, 4
          %s1754 = int_to_ptr.vmem [resolvable:$true] %s1753
          %1759 = dma.vmem_to_hbm [thread:$0]  %s1754, 4096, %s1752, %s1740, 128, 128, 8
        $region48: #{tpu_custom_call.1} parent=35 // pred_fallthru
          _
      $region36: #{tpu_custom_call.1} parent=5 // pred_fallthru
        _
      %p1760 = scmp.le.s32.totalorder 2, %s16
      // Predicated region
      $region49: #{tpu_custom_call.1} parent=5 // pred_check
        %p1761 = pneg %p1760
      $region50: #{tpu_custom_call.1} parent=5 // pred_check_branch
        %1763 = sbr.rel (%p1761) target = $region52
      $region51: #{tpu_custom_call.1} parent=5 // pred_region
        %s1764 = ssub.s32 %s16, 2
        // Predicated region
        $region53: #{tpu_custom_call.1} parent=51 // pred_check
          %p1765 = pneg %p134
        $region54: #{tpu_custom_call.1} parent=51 // pred_check_branch
          %1767 = sbr.rel (%p1765) target = $region56
        $region55: #{tpu_custom_call.1} parent=51 // pred_region
          %s1768 = sand.u32 %s119, 1
          %s1769 = scalar_lea.sflag [#allocation5], %s1768
          %s1770 = sand.u32 %s119, 1
          %s1771 = smul.addr %s1770, 256
          %s1772 = scalar_lea.vmem [#allocation6], %s1771
          %1773 = dma.done %s1769, 4096
        $region56: #{tpu_custom_call.1} parent=51 // pred_fallthru
          _
      $region52: #{tpu_custom_call.1} parent=5 // pred_fallthru
        _
    $region6: #{tpu_custom_call.1} parent=1 // loop_footer
      %s20 = sadd.s32 1, %s16
    $region7: #{tpu_custom_call.1} parent=1 // loop_footer_branch
      %15 = sbr.rel target = $region3
    $region8: #{tpu_custom_call.1} parent=1 // loop_exit
      _
    %1774 = vsyncpa [#allocation4], 1
    %s1775 = scalar_lea.sflag [#allocation4], 1
    %1776 = vsyncpa %s1775, 1
    %1777 = vsyncpa [#allocation5], 1
    %s1778 = scalar_lea.sflag [#allocation5], 1
    %1779 = vsyncpa %s1778, 1

</llo_original>
